<compile_context>
chip_gen: v5e
topology: v5e:2x2
jax: 0.10.0
libtpu: 0.0.40
codegen_flags: <defaults>
</compile_context>

<pallas_src>
import functools

import jax
import jax.numpy as jnp
from jax import lax
from jax.experimental import pallas as pl
from jax.experimental.pallas import tpu as pltpu


# -----------------------------------------------------------------------------
# Kernel: row-tiled LayerNorm over the last dimension.
# -----------------------------------------------------------------------------
def _layernorm_kernel(x_ref, w_ref, b_ref, o_ref, *, eps):
    # x_ref: (TM, C), w_ref/b_ref: (1, C), o_ref: (TM, C)
    x = x_ref[...].astype(jnp.float32)
    mu = jnp.mean(x, axis=-1, keepdims=True)
    xc = x - mu
    var = jnp.mean(xc * xc, axis=-1, keepdims=True)          # unbiased=False
    inv = lax.rsqrt(var + eps)                                # EUP, not sqrt+div
    w = w_ref[...].astype(jnp.float32)                        # (1, C) broadcasts
    b = b_ref[...].astype(jnp.float32)
    o_ref[...] = (xc * inv * w + b).astype(o_ref.dtype)


def _pick_row_tile(M, C, itemsize):
    """Largest row tile <= 512 that keeps in+out double-buffered blocks ~<=8MiB."""
    vmem_budget = 8 * 1024 * 1024
    cap = vmem_budget // max(1, 4 * C * itemsize)             # 2 bufs x (in + out)
    tm = max(8, min(512, (cap // 8) * 8))                     # sublane-aligned
    m_pad8 = ((M + 7) // 8) * 8
    return min(tm, m_pad8)


@functools.partial(jax.jit, static_argnames=("eps",))
def withbias_layernorm(x, weight, bias, eps=1e-5):
    """x: (..., C); weight, bias: (C,). Normalizes over the last dim."""
    orig_shape = x.shape
    C = orig_shape[-1]
    M = 1
    for d in orig_shape[:-1]:
        M *= int(d)

    x2d = x.reshape(M, C)
    tm = _pick_row_tile(M, C, jnp.dtype(x.dtype).itemsize)
    Mp = pl.cdiv(M, tm) * tm
    if Mp != M:
        # Zero rows are safe: mu=0, var=0, out = bias (finite via eps); sliced off below.
        x2d = jnp.pad(x2d, ((0, Mp - M), (0, 0)))

    w2d = weight.reshape(1, C)
    b2d = bias.reshape(1, C)

    out = pl.pallas_call(
        functools.partial(_layernorm_kernel, eps=float(eps)),
        out_shape=jax.ShapeDtypeStruct((Mp, C), x.dtype),
        grid=(Mp // tm,),
        in_specs=[
            pl.BlockSpec((tm, C), lambda i: (i, 0)),
            pl.BlockSpec((1, C), lambda i: (0, 0)),
            pl.BlockSpec((1, C), lambda i: (0, 0)),
        ],
        out_specs=pl.BlockSpec((tm, C), lambda i: (i, 0)),
        compiler_params=pltpu.CompilerParams(
            dimension_semantics=("parallel",),
            vmem_limit_bytes=32 * 1024 * 1024,
        ),
    )(x2d, w2d, b2d)

    if Mp != M:
        out = out[:M]
    return out.reshape(orig_shape)


# -----------------------------------------------------------------------------
# Pure-JAX reference (matches the PyTorch forward exactly).
# -----------------------------------------------------------------------------
def reference_layernorm(x, weight, bias, eps=1e-5):
    mu = jnp.mean(x, axis=-1, keepdims=True)
    sigma = jnp.mean((x - mu) ** 2, axis=-1, keepdims=True)   # unbiased=False
    return (x - mu) / jnp.sqrt(sigma + eps) * weight + bias


# -----------------------------------------------------------------------------
if __name__ == "__main__":
    key = jax.random.PRNGKey(0)
    kx, kw, kb, kx2 = jax.random.split(key, 4)

    # Small shapes consistent with the module: normalized_shape = 32 (last dim).
    B, H, W, C = 2, 16, 16, 32
    x = jax.random.normal(kx, (B, H, W, C), jnp.float32)
    weight = 1.0 + 0.1 * jax.random.normal(kw, (C,), jnp.float32)
    bias = 0.1 * jax.random.normal(kb, (C,), jnp.float32)

    out = jax.block_until_ready(withbias_layernorm(x, weight, bias))
    ref = reference_layernorm(x, weight, bias)
    assert out.shape == x.shape
    assert jnp.allclose(out, ref, rtol=1e-5, atol=1e-5), (
        float(jnp.max(jnp.abs(out - ref)))
    )

    # Non-tile-aligned row count exercises the cdiv + zero-pad tail path.
    x2 = jax.random.normal(kx2, (2, 7, 5, C), jnp.float32)
    out2 = jax.block_until_ready(withbias_layernorm(x2, weight, bias))
    ref2 = reference_layernorm(x2, weight, bias)
    assert jnp.allclose(out2, ref2, rtol=1e-5, atol=1e-5), (
        float(jnp.max(jnp.abs(out2 - ref2)))
    )

    print("KERNEL_OK")
</pallas_src>

<mosaic_0001>
module attributes {stable_mosaic.version = 11 : i64} {
  func.func @_layernorm_kernel(%arg0: i32, %arg1: memref<512x32xf32, #tpu.memory_space<vmem>>, %arg2: memref<1x32xf32, #tpu.memory_space<vmem>>, %arg3: memref<1x32xf32, #tpu.memory_space<vmem>>, %arg4: memref<512x32xf32, #tpu.memory_space<vmem>>) attributes {dimension_semantics = [#tpu.dimension_semantics<parallel>], iteration_bounds = array<i64: 1>, scalar_prefetch = 0 : i64, scratch_operands = 0 : i64, tpu.core_type = #tpu.core_type<tc>, window_params = [{transform_indices = @transform_0, window_bounds = array<i64: 512, 32>}, {pipeline_mode = #tpu.pipeline_mode<synchronous>, transform_indices = @transform_1, window_bounds = array<i64: 1, 32>}, {pipeline_mode = #tpu.pipeline_mode<synchronous>, transform_indices = @transform_2, window_bounds = array<i64: 1, 32>}, {transform_indices = @transform_3, window_bounds = array<i64: 512, 32>}]} {
    %c0 = arith.constant 0 : index
    %c0_0 = arith.constant 0 : index
    %0 = vector.load %arg1[%c0, %c0_0] : memref<512x32xf32, #tpu.memory_space<vmem>>, vector<512x32xf32>
    %cst = arith.constant dense<0.000000e+00> : vector<512xf32>
    %1 = vector.multi_reduction <add>, %0, %cst [1] : vector<512x32xf32> to vector<512xf32>
    %2 = vector.shape_cast %1 : vector<512xf32> to vector<512x1xf32>
    %cst_1 = arith.constant 3.200000e+01 : f32
    %3 = vector.broadcast %cst_1 : f32 to vector<512x1xf32>
    %4 = arith.divf %2, %3 : vector<512x1xf32>
    %5 = vector.broadcast %4 : vector<512x1xf32> to vector<512x32xf32>
    %6 = arith.subf %0, %5 : vector<512x32xf32>
    %7 = arith.mulf %6, %6 : vector<512x32xf32>
    %cst_2 = arith.constant dense<0.000000e+00> : vector<512xf32>
    %8 = vector.multi_reduction <add>, %7, %cst_2 [1] : vector<512x32xf32> to vector<512xf32>
    %9 = vector.shape_cast %8 : vector<512xf32> to vector<512x1xf32>
    %cst_3 = arith.constant 3.200000e+01 : f32
    %10 = vector.broadcast %cst_3 : f32 to vector<512x1xf32>
    %11 = arith.divf %9, %10 : vector<512x1xf32>
    %cst_4 = arith.constant 9.99999974E-6 : f32
    %12 = vector.broadcast %cst_4 : f32 to vector<512x1xf32>
    %13 = arith.addf %11, %12 : vector<512x1xf32>
    %14 = math.rsqrt %13 : vector<512x1xf32>
    %c0_5 = arith.constant 0 : index
    %c0_6 = arith.constant 0 : index
    %15 = vector.load %arg2[%c0_5, %c0_6] : memref<1x32xf32, #tpu.memory_space<vmem>>, vector<1x32xf32>
    %c0_7 = arith.constant 0 : index
    %c0_8 = arith.constant 0 : index
    %16 = vector.load %arg3[%c0_7, %c0_8] : memref<1x32xf32, #tpu.memory_space<vmem>>, vector<1x32xf32>
    %17 = vector.broadcast %14 : vector<512x1xf32> to vector<512x32xf32>
    %18 = arith.mulf %6, %17 : vector<512x32xf32>
    %19 = vector.broadcast %15 : vector<1x32xf32> to vector<512x32xf32>
    %20 = arith.mulf %18, %19 : vector<512x32xf32>
    %21 = vector.broadcast %16 : vector<1x32xf32> to vector<512x32xf32>
    %22 = arith.addf %20, %21 : vector<512x32xf32>
    %c0_9 = arith.constant 0 : index
    %c0_10 = arith.constant 0 : index
    %23 = vector.load %arg4[%c0_9, %c0_10] : memref<512x32xf32, #tpu.memory_space<vmem>>, vector<512x32xf32>
    tpu.vector_store %arg4[%c0_9, %c0_10], %22 {strides = array<i32>} : memref<512x32xf32, #tpu.memory_space<vmem>>, vector<512x32xf32>,
    return
  }
  func.func @transform_0(%arg0: i32) -> (i32, i32) {
    %c0_i32 = arith.constant 0 : i32
    %c0_i32_0 = arith.constant 0 : i32
    return %arg0, %c0_i32 : i32, i32
  }
  func.func @transform_1(%arg0: i32) -> (i32, i32) {
    %c0_i32 = arith.constant 0 : i32
    %c0_i32_0 = arith.constant 0 : i32
    %c0_i32_1 = arith.constant 0 : i32
    return %c0_i32, %c0_i32_0 : i32, i32
  }
  func.func @transform_2(%arg0: i32) -> (i32, i32) {
    %c0_i32 = arith.constant 0 : i32
    %c0_i32_0 = arith.constant 0 : i32
    %c0_i32_1 = arith.constant 0 : i32
    return %c0_i32, %c0_i32_0 : i32, i32
  }
  func.func @transform_3(%arg0: i32) -> (i32, i32) {
    %c0_i32 = arith.constant 0 : i32
    %c0_i32_0 = arith.constant 0 : i32
    return %arg0, %c0_i32 : i32, i32
  }
}

</mosaic_0001>

<llo_original>
// kernel: withbias_layernorm.1
$region0: #{withbias_layernorm.1}
  #allocation0 [shape = 'u32[]', space=smem, size = 0x4, offset = 0x4, fixed_abs, tag = 'smem constant byte address 0x4 - core index']
  #allocation1 [shape = 'u32[72,128]{1,0:T(1,128)}', space=vmem, size = 0x9000, scoped, tag = 'internal scratch']
  %s0 = inlined_call_operand.hbm [shape: f32[512,32], index: 0, kind: input, shape index: {}]
  %s1 = inlined_call_operand.vmem [shape: f32[1,32], index: 1, kind: input, shape index: {}]
  %s2 = inlined_call_operand.vmem [shape: f32[1,32], index: 2, kind: input, shape index: {}]
  %s3 = inlined_call_operand.hbm [shape: f32[512,32], index: 3, kind: output, shape index: {}]
  %s4 = sld [smem:[#allocation0]]
  $region26: #{withbias_layernorm.1} parent=0
    _
  %s6 = ssub.s32 1, %s4
  %s7 = scalar_select 0, %s6, %s4
  $region1: #{withbias_layernorm.1} parent=0
    #allocation2 [shape = 'u8[262144]{0}', space=vmem, size = 0x40000, scoped, tag = 'input window, operand 0, single buffered']
    #allocation3 [shape = 's32[1]{0}', space=sflag, size = 0x4, scoped, tag = 'scoped memory for withbias_layernorm.1']
    #allocation4 [shape = 's32[1]{0}', space=sflag, size = 0x4, scoped, tag = 'scoped memory for withbias_layernorm.1']
    #allocation5 [shape = 'u8[262144]{0}', space=vmem, size = 0x40000, scoped, tag = 'output window, operand 0, single buffered']
    %8 = vsyncpa [#allocation3], 0
    %9 = vsyncpa [#allocation4], 0
    // Predicated region
    $region2: #{withbias_layernorm.1} parent=1 // pred_check
      _
    $region3: #{withbias_layernorm.1} parent=1 // pred_check_branch
      %11 = sbr.rel (0) target = $region5
    $region4: #{withbias_layernorm.1} parent=1 // pred_region
      %13 = vsyncadd [#allocation3], 0
      %s14 = sshll.u32 %s0, 4
      %s15 = int_to_ptr.hbm [resolvable:$true] %s14
      %s16 = sshll.u32 [#allocation2], 4
      %s17 = int_to_ptr.vmem [resolvable:$true] %s16
      %22 = dma.hbm_to_vmem [thread:$0]  %s15, 8192, %s17, [#allocation3], 128, 128, 8
    $region5: #{withbias_layernorm.1} parent=1 // pred_fallthru
      _
    // Predicated region
    $region6: #{withbias_layernorm.1} parent=1 // pred_check
      _
    $region7: #{withbias_layernorm.1} parent=1 // pred_check_branch
      %24 = sbr.rel (0) target = $region9
    $region8: #{withbias_layernorm.1} parent=1 // pred_region
      _
    $region9: #{withbias_layernorm.1} parent=1 // pred_fallthru
      _
    // Predicated region
    $region10: #{withbias_layernorm.1} parent=1 // pred_check
      _
    $region11: #{withbias_layernorm.1} parent=1 // pred_check_branch
      %26 = sbr.rel (0) target = $region13
    $region12: #{withbias_layernorm.1} parent=1 // pred_region
      _
    $region13: #{withbias_layernorm.1} parent=1 // pred_fallthru
      _
    // Predicated region
    $region14: #{withbias_layernorm.1} parent=1 // pred_check
      _
    $region15: #{withbias_layernorm.1} parent=1 // pred_check_branch
      %28 = sbr.rel (0) target = $region17
    $region16: #{withbias_layernorm.1} parent=1 // pred_region
      %30 = dma.done [#allocation3], 8192
    $region17: #{withbias_layernorm.1} parent=1 // pred_fallthru
      _
    %v31 = vld [vmem:[#allocation2] sm:$0xff]
    %v32 = vld [vmem:[#allocation2 + $0x8] sm:$0xff]
    %v33 = vld [vmem:[#allocation2 + $0x10] sm:$0xff]
    %v34 = vld [vmem:[#allocation2 + $0x18] sm:$0xff]
    %v35 = vld [vmem:[#allocation2 + $0x20] sm:$0xff]
    %v36 = vld [vmem:[#allocation2 + $0x28] sm:$0xff]
    %v37 = vld [vmem:[#allocation2 + $0x30] sm:$0xff]
    %v38 = vld [vmem:[#allocation2 + $0x38] sm:$0xff]
    %v39 = vld [vmem:[#allocation2 + $0x40] sm:$0xff]
    %v40 = vld [vmem:[#allocation2 + $0x48] sm:$0xff]
    %v41 = vld [vmem:[#allocation2 + $0x50] sm:$0xff]
    %v42 = vld [vmem:[#allocation2 + $0x58] sm:$0xff]
    %v43 = vld [vmem:[#allocation2 + $0x60] sm:$0xff]
    %v44 = vld [vmem:[#allocation2 + $0x68] sm:$0xff]
    %v45 = vld [vmem:[#allocation2 + $0x70] sm:$0xff]
    %v46 = vld [vmem:[#allocation2 + $0x78] sm:$0xff]
    %v47 = vld [vmem:[#allocation2 + $0x80] sm:$0xff]
    %v48 = vld [vmem:[#allocation2 + $0x88] sm:$0xff]
    %v49 = vld [vmem:[#allocation2 + $0x90] sm:$0xff]
    %v50 = vld [vmem:[#allocation2 + $0x98] sm:$0xff]
    %v51 = vld [vmem:[#allocation2 + $0xa0] sm:$0xff]
    %v52 = vld [vmem:[#allocation2 + $0xa8] sm:$0xff]
    %v53 = vld [vmem:[#allocation2 + $0xb0] sm:$0xff]
    %v54 = vld [vmem:[#allocation2 + $0xb8] sm:$0xff]
    %v55 = vld [vmem:[#allocation2 + $0xc0] sm:$0xff]
    %v56 = vld [vmem:[#allocation2 + $0xc8] sm:$0xff]
    %v57 = vld [vmem:[#allocation2 + $0xd0] sm:$0xff]
    %v58 = vld [vmem:[#allocation2 + $0xd8] sm:$0xff]
    %v59 = vld [vmem:[#allocation2 + $0xe0] sm:$0xff]
    %v60 = vld [vmem:[#allocation2 + $0xe8] sm:$0xff]
    %v61 = vld [vmem:[#allocation2 + $0xf0] sm:$0xff]
    %v62 = vld [vmem:[#allocation2 + $0xf8] sm:$0xff]
    %v63 = vld [vmem:[#allocation2 + $0x100] sm:$0xff]
    %v64 = vld [vmem:[#allocation2 + $0x108] sm:$0xff]
    %v65 = vld [vmem:[#allocation2 + $0x110] sm:$0xff]
    %v66 = vld [vmem:[#allocation2 + $0x118] sm:$0xff]
    %v67 = vld [vmem:[#allocation2 + $0x120] sm:$0xff]
    %v68 = vld [vmem:[#allocation2 + $0x128] sm:$0xff]
    %v69 = vld [vmem:[#allocation2 + $0x130] sm:$0xff]
    %v70 = vld [vmem:[#allocation2 + $0x138] sm:$0xff]
    %v71 = vld [vmem:[#allocation2 + $0x140] sm:$0xff]
    %v72 = vld [vmem:[#allocation2 + $0x148] sm:$0xff]
    %v73 = vld [vmem:[#allocation2 + $0x150] sm:$0xff]
    %v74 = vld [vmem:[#allocation2 + $0x158] sm:$0xff]
    %v75 = vld [vmem:[#allocation2 + $0x160] sm:$0xff]
    %v76 = vld [vmem:[#allocation2 + $0x168] sm:$0xff]
    %v77 = vld [vmem:[#allocation2 + $0x170] sm:$0xff]
    %v78 = vld [vmem:[#allocation2 + $0x178] sm:$0xff]
    %v79 = vld [vmem:[#allocation2 + $0x180] sm:$0xff]
    %v80 = vld [vmem:[#allocation2 + $0x188] sm:$0xff]
    %v81 = vld [vmem:[#allocation2 + $0x190] sm:$0xff]
    %v82 = vld [vmem:[#allocation2 + $0x198] sm:$0xff]
    %v83 = vld [vmem:[#allocation2 + $0x1a0] sm:$0xff]
    %v84 = vld [vmem:[#allocation2 + $0x1a8] sm:$0xff]
    %v85 = vld [vmem:[#allocation2 + $0x1b0] sm:$0xff]
    %v86 = vld [vmem:[#allocation2 + $0x1b8] sm:$0xff]
    %v87 = vld [vmem:[#allocation2 + $0x1c0] sm:$0xff]
    %v88 = vld [vmem:[#allocation2 + $0x1c8] sm:$0xff]
    %v89 = vld [vmem:[#allocation2 + $0x1d0] sm:$0xff]
    %v90 = vld [vmem:[#allocation2 + $0x1d8] sm:$0xff]
    %v91 = vld [vmem:[#allocation2 + $0x1e0] sm:$0xff]
    %v92 = vld [vmem:[#allocation2 + $0x1e8] sm:$0xff]
    %v93 = vld [vmem:[#allocation2 + $0x1f0] sm:$0xff]
    %v94 = vld [vmem:[#allocation2 + $0x1f8] sm:$0xff]
    %vm95 = vcmask 261120
    %v96 = vsel %vm95, %v31, 0.0
    %97 = vadd.xlane.f32.xlu0 %v96
    %v98 = vpop.xlane.xlu0 %97
    %v99 = vsel %vm95, %v32, 0.0
    %100 = vadd.xlane.f32.xlu0 %v99
    %v101 = vpop.xlane.xlu0 %100
    %v102 = vsel %vm95, %v33, 0.0
    %103 = vadd.xlane.f32.xlu0 %v102
    %v104 = vpop.xlane.xlu0 %103
    %v105 = vsel %vm95, %v34, 0.0
    %106 = vadd.xlane.f32.xlu0 %v105
    %v107 = vpop.xlane.xlu0 %106
    %v108 = vsel %vm95, %v35, 0.0
    %109 = vadd.xlane.f32.xlu0 %v108
    %v110 = vpop.xlane.xlu0 %109
    %v111 = vsel %vm95, %v36, 0.0
    %112 = vadd.xlane.f32.xlu0 %v111
    %v113 = vpop.xlane.xlu0 %112
    %v114 = vsel %vm95, %v37, 0.0
    %115 = vadd.xlane.f32.xlu0 %v114
    %v116 = vpop.xlane.xlu0 %115
    %v117 = vsel %vm95, %v38, 0.0
    %118 = vadd.xlane.f32.xlu0 %v117
    %v119 = vpop.xlane.xlu0 %118
    %v120 = vsel %vm95, %v39, 0.0
    %121 = vadd.xlane.f32.xlu0 %v120
    %v122 = vpop.xlane.xlu0 %121
    %v123 = vsel %vm95, %v40, 0.0
    %124 = vadd.xlane.f32.xlu0 %v123
    %v125 = vpop.xlane.xlu0 %124
    %v126 = vsel %vm95, %v41, 0.0
    %127 = vadd.xlane.f32.xlu0 %v126
    %v128 = vpop.xlane.xlu0 %127
    %v129 = vsel %vm95, %v42, 0.0
    %130 = vadd.xlane.f32.xlu0 %v129
    %v131 = vpop.xlane.xlu0 %130
    %v132 = vsel %vm95, %v43, 0.0
    %133 = vadd.xlane.f32.xlu0 %v132
    %v134 = vpop.xlane.xlu0 %133
    %v135 = vsel %vm95, %v44, 0.0
    %136 = vadd.xlane.f32.xlu0 %v135
    %v137 = vpop.xlane.xlu0 %136
    %v138 = vsel %vm95, %v45, 0.0
    %139 = vadd.xlane.f32.xlu0 %v138
    %v140 = vpop.xlane.xlu0 %139
    %v141 = vsel %vm95, %v46, 0.0
    %142 = vadd.xlane.f32.xlu0 %v141
    %v143 = vpop.xlane.xlu0 %142
    %v144 = vsel %vm95, %v47, 0.0
    %145 = vadd.xlane.f32.xlu0 %v144
    %v146 = vpop.xlane.xlu0 %145
    %v147 = vsel %vm95, %v48, 0.0
    %148 = vadd.xlane.f32.xlu0 %v147
    %v149 = vpop.xlane.xlu0 %148
    %v150 = vsel %vm95, %v49, 0.0
    %151 = vadd.xlane.f32.xlu0 %v150
    %v152 = vpop.xlane.xlu0 %151
    %v153 = vsel %vm95, %v50, 0.0
    %154 = vadd.xlane.f32.xlu0 %v153
    %v155 = vpop.xlane.xlu0 %154
    %v156 = vsel %vm95, %v51, 0.0
    %157 = vadd.xlane.f32.xlu0 %v156
    %v158 = vpop.xlane.xlu0 %157
    %v159 = vsel %vm95, %v52, 0.0
    %160 = vadd.xlane.f32.xlu0 %v159
    %v161 = vpop.xlane.xlu0 %160
    %v162 = vsel %vm95, %v53, 0.0
    %163 = vadd.xlane.f32.xlu0 %v162
    %v164 = vpop.xlane.xlu0 %163
    %v165 = vsel %vm95, %v54, 0.0
    %166 = vadd.xlane.f32.xlu0 %v165
    %v167 = vpop.xlane.xlu0 %166
    %v168 = vsel %vm95, %v55, 0.0
    %169 = vadd.xlane.f32.xlu0 %v168
    %v170 = vpop.xlane.xlu0 %169
    %v171 = vsel %vm95, %v56, 0.0
    %172 = vadd.xlane.f32.xlu0 %v171
    %v173 = vpop.xlane.xlu0 %172
    %v174 = vsel %vm95, %v57, 0.0
    %175 = vadd.xlane.f32.xlu0 %v174
    %v176 = vpop.xlane.xlu0 %175
    %v177 = vsel %vm95, %v58, 0.0
    %178 = vadd.xlane.f32.xlu0 %v177
    %v179 = vpop.xlane.xlu0 %178
    %v180 = vsel %vm95, %v59, 0.0
    %181 = vadd.xlane.f32.xlu0 %v180
    %v182 = vpop.xlane.xlu0 %181
    %v183 = vsel %vm95, %v60, 0.0
    %184 = vadd.xlane.f32.xlu0 %v183
    %v185 = vpop.xlane.xlu0 %184
    %v186 = vsel %vm95, %v61, 0.0
    %187 = vadd.xlane.f32.xlu0 %v186
    %v188 = vpop.xlane.xlu0 %187
    %v189 = vsel %vm95, %v62, 0.0
    %190 = vadd.xlane.f32.xlu0 %v189
    %v191 = vpop.xlane.xlu0 %190
    %v192 = vsel %vm95, %v63, 0.0
    %193 = vadd.xlane.f32.xlu0 %v192
    %v194 = vpop.xlane.xlu0 %193
    %v195 = vsel %vm95, %v64, 0.0
    %196 = vadd.xlane.f32.xlu0 %v195
    %v197 = vpop.xlane.xlu0 %196
    %v198 = vsel %vm95, %v65, 0.0
    %199 = vadd.xlane.f32.xlu0 %v198
    %v200 = vpop.xlane.xlu0 %199
    %v201 = vsel %vm95, %v66, 0.0
    %202 = vadd.xlane.f32.xlu0 %v201
    %v203 = vpop.xlane.xlu0 %202
    %v204 = vsel %vm95, %v67, 0.0
    %205 = vadd.xlane.f32.xlu0 %v204
    %v206 = vpop.xlane.xlu0 %205
    %v207 = vsel %vm95, %v68, 0.0
    %208 = vadd.xlane.f32.xlu0 %v207
    %v209 = vpop.xlane.xlu0 %208
    %v210 = vsel %vm95, %v69, 0.0
    %211 = vadd.xlane.f32.xlu0 %v210
    %v212 = vpop.xlane.xlu0 %211
    %v213 = vsel %vm95, %v70, 0.0
    %214 = vadd.xlane.f32.xlu0 %v213
    %v215 = vpop.xlane.xlu0 %214
    %v216 = vsel %vm95, %v71, 0.0
    %217 = vadd.xlane.f32.xlu0 %v216
    %v218 = vpop.xlane.xlu0 %217
    %v219 = vsel %vm95, %v72, 0.0
    %220 = vadd.xlane.f32.xlu0 %v219
    %v221 = vpop.xlane.xlu0 %220
    %v222 = vsel %vm95, %v73, 0.0
    %223 = vadd.xlane.f32.xlu0 %v222
    %v224 = vpop.xlane.xlu0 %223
    %v225 = vsel %vm95, %v74, 0.0
    %226 = vadd.xlane.f32.xlu0 %v225
    %v227 = vpop.xlane.xlu0 %226
    %v228 = vsel %vm95, %v75, 0.0
    %229 = vadd.xlane.f32.xlu0 %v228
    %v230 = vpop.xlane.xlu0 %229
    %v231 = vsel %vm95, %v76, 0.0
    %232 = vadd.xlane.f32.xlu0 %v231
    %v233 = vpop.xlane.xlu0 %232
    %v234 = vsel %vm95, %v77, 0.0
    %235 = vadd.xlane.f32.xlu0 %v234
    %v236 = vpop.xlane.xlu0 %235
    %v237 = vsel %vm95, %v78, 0.0
    %238 = vadd.xlane.f32.xlu0 %v237
    %v239 = vpop.xlane.xlu0 %238
    %v240 = vsel %vm95, %v79, 0.0
    %241 = vadd.xlane.f32.xlu0 %v240
    %v242 = vpop.xlane.xlu0 %241
    %v243 = vsel %vm95, %v80, 0.0
    %244 = vadd.xlane.f32.xlu0 %v243
    %v245 = vpop.xlane.xlu0 %244
    %v246 = vsel %vm95, %v81, 0.0
    %247 = vadd.xlane.f32.xlu0 %v246
    %v248 = vpop.xlane.xlu0 %247
    %v249 = vsel %vm95, %v82, 0.0
    %250 = vadd.xlane.f32.xlu0 %v249
    %v251 = vpop.xlane.xlu0 %250
    %v252 = vsel %vm95, %v83, 0.0
    %253 = vadd.xlane.f32.xlu0 %v252
    %v254 = vpop.xlane.xlu0 %253
    %v255 = vsel %vm95, %v84, 0.0
    %256 = vadd.xlane.f32.xlu0 %v255
    %v257 = vpop.xlane.xlu0 %256
    %v258 = vsel %vm95, %v85, 0.0
    %259 = vadd.xlane.f32.xlu0 %v258
    %v260 = vpop.xlane.xlu0 %259
    %v261 = vsel %vm95, %v86, 0.0
    %262 = vadd.xlane.f32.xlu0 %v261
    %v263 = vpop.xlane.xlu0 %262
    %v264 = vsel %vm95, %v87, 0.0
    %265 = vadd.xlane.f32.xlu0 %v264
    %v266 = vpop.xlane.xlu0 %265
    %v267 = vsel %vm95, %v88, 0.0
    %268 = vadd.xlane.f32.xlu0 %v267
    %v269 = vpop.xlane.xlu0 %268
    %v270 = vsel %vm95, %v89, 0.0
    %271 = vadd.xlane.f32.xlu0 %v270
    %v272 = vpop.xlane.xlu0 %271
    %v273 = vsel %vm95, %v90, 0.0
    %274 = vadd.xlane.f32.xlu0 %v273
    %v275 = vpop.xlane.xlu0 %274
    %v276 = vsel %vm95, %v91, 0.0
    %277 = vadd.xlane.f32.xlu0 %v276
    %v278 = vpop.xlane.xlu0 %277
    %v279 = vsel %vm95, %v92, 0.0
    %280 = vadd.xlane.f32.xlu0 %v279
    %v281 = vpop.xlane.xlu0 %280
    %v282 = vsel %vm95, %v93, 0.0
    %283 = vadd.xlane.f32.xlu0 %v282
    %v284 = vpop.xlane.xlu0 %283
    %v285 = vsel %vm95, %v94, 0.0
    %286 = vadd.xlane.f32.xlu0 %v285
    %v287 = vpop.xlane.xlu0 %286
    %v288 = vrcp.pop 32.0
    %v289 = vmul.f32 32.0, %v288
    %v290 = vsub.f32 1.0, %v289
    %v291 = vmul.f32 %v288, %v290
    %v292 = vadd.f32 %v288, %v291
    %vm293 = vweird.f32 %v288
    %v294 = vsel %vm293, %v288, %v292
    %v295 = vmul.f32 %v98, %v294
    %v296 = vmul.f32 %v101, %v294
    %v297 = vmul.f32 %v104, %v294
    %v298 = vmul.f32 %v107, %v294
    %v299 = vmul.f32 %v110, %v294
    %v300 = vmul.f32 %v113, %v294
    %v301 = vmul.f32 %v116, %v294
    %v302 = vmul.f32 %v119, %v294
    %v303 = vmul.f32 %v122, %v294
    %v304 = vmul.f32 %v125, %v294
    %v305 = vmul.f32 %v128, %v294
    %v306 = vmul.f32 %v131, %v294
    %v307 = vmul.f32 %v134, %v294
    %v308 = vmul.f32 %v137, %v294
    %v309 = vmul.f32 %v140, %v294
    %v310 = vmul.f32 %v143, %v294
    %v311 = vmul.f32 %v146, %v294
    %v312 = vmul.f32 %v149, %v294
    %v313 = vmul.f32 %v152, %v294
    %v314 = vmul.f32 %v155, %v294
    %v315 = vmul.f32 %v158, %v294
    %v316 = vmul.f32 %v161, %v294
    %v317 = vmul.f32 %v164, %v294
    %v318 = vmul.f32 %v167, %v294
    %v319 = vmul.f32 %v170, %v294
    %v320 = vmul.f32 %v173, %v294
    %v321 = vmul.f32 %v176, %v294
    %v322 = vmul.f32 %v179, %v294
    %v323 = vmul.f32 %v182, %v294
    %v324 = vmul.f32 %v185, %v294
    %v325 = vmul.f32 %v188, %v294
    %v326 = vmul.f32 %v191, %v294
    %v327 = vmul.f32 %v194, %v294
    %v328 = vmul.f32 %v197, %v294
    %v329 = vmul.f32 %v200, %v294
    %v330 = vmul.f32 %v203, %v294
    %v331 = vmul.f32 %v206, %v294
    %v332 = vmul.f32 %v209, %v294
    %v333 = vmul.f32 %v212, %v294
    %v334 = vmul.f32 %v215, %v294
    %v335 = vmul.f32 %v218, %v294
    %v336 = vmul.f32 %v221, %v294
    %v337 = vmul.f32 %v224, %v294
    %v338 = vmul.f32 %v227, %v294
    %v339 = vmul.f32 %v230, %v294
    %v340 = vmul.f32 %v233, %v294
    %v341 = vmul.f32 %v236, %v294
    %v342 = vmul.f32 %v239, %v294
    %v343 = vmul.f32 %v242, %v294
    %v344 = vmul.f32 %v245, %v294
    %v345 = vmul.f32 %v248, %v294
    %v346 = vmul.f32 %v251, %v294
    %v347 = vmul.f32 %v254, %v294
    %v348 = vmul.f32 %v257, %v294
    %v349 = vmul.f32 %v260, %v294
    %v350 = vmul.f32 %v263, %v294
    %v351 = vmul.f32 %v266, %v294
    %v352 = vmul.f32 %v269, %v294
    %v353 = vmul.f32 %v272, %v294
    %v354 = vmul.f32 %v275, %v294
    %v355 = vmul.f32 %v278, %v294
    %v356 = vmul.f32 %v281, %v294
    %v357 = vmul.f32 %v284, %v294
    %v358 = vmul.f32 %v287, %v294
    %v359 = vsub.f32 %v31, %v295
    %v360 = vsub.f32 %v32, %v296
    %v361 = vsub.f32 %v33, %v297
    %v362 = vsub.f32 %v34, %v298
    %v363 = vsub.f32 %v35, %v299
    %v364 = vsub.f32 %v36, %v300
    %v365 = vsub.f32 %v37, %v301
    %v366 = vsub.f32 %v38, %v302
    %v367 = vsub.f32 %v39, %v303
    %v368 = vsub.f32 %v40, %v304
    %v369 = vsub.f32 %v41, %v305
    %v370 = vsub.f32 %v42, %v306
    %v371 = vsub.f32 %v43, %v307
    %v372 = vsub.f32 %v44, %v308
    %v373 = vsub.f32 %v45, %v309
    %v374 = vsub.f32 %v46, %v310
    %v375 = vsub.f32 %v47, %v311
    %v376 = vsub.f32 %v48, %v312
    %v377 = vsub.f32 %v49, %v313
    %v378 = vsub.f32 %v50, %v314
    %v379 = vsub.f32 %v51, %v315
    %v380 = vsub.f32 %v52, %v316
    %v381 = vsub.f32 %v53, %v317
    %v382 = vsub.f32 %v54, %v318
    %v383 = vsub.f32 %v55, %v319
    %v384 = vsub.f32 %v56, %v320
    %v385 = vsub.f32 %v57, %v321
    %v386 = vsub.f32 %v58, %v322
    %v387 = vsub.f32 %v59, %v323
    %v388 = vsub.f32 %v60, %v324
    %v389 = vsub.f32 %v61, %v325
    %v390 = vsub.f32 %v62, %v326
    %v391 = vsub.f32 %v63, %v327
    %v392 = vsub.f32 %v64, %v328
    %v393 = vsub.f32 %v65, %v329
    %v394 = vsub.f32 %v66, %v330
    %v395 = vsub.f32 %v67, %v331
    %v396 = vsub.f32 %v68, %v332
    %v397 = vsub.f32 %v69, %v333
    %v398 = vsub.f32 %v70, %v334
    %v399 = vsub.f32 %v71, %v335
    %v400 = vsub.f32 %v72, %v336
    %v401 = vsub.f32 %v73, %v337
    %v402 = vsub.f32 %v74, %v338
    %v403 = vsub.f32 %v75, %v339
    %v404 = vsub.f32 %v76, %v340
    %v405 = vsub.f32 %v77, %v341
    %v406 = vsub.f32 %v78, %v342
    %v407 = vsub.f32 %v79, %v343
    %v408 = vsub.f32 %v80, %v344
    %v409 = vsub.f32 %v81, %v345
    %v410 = vsub.f32 %v82, %v346
    %v411 = vsub.f32 %v83, %v347
    %v412 = vsub.f32 %v84, %v348
    %v413 = vsub.f32 %v85, %v349
    %v414 = vsub.f32 %v86, %v350
    %v415 = vsub.f32 %v87, %v351
    %v416 = vsub.f32 %v88, %v352
    %v417 = vsub.f32 %v89, %v353
    %v418 = vsub.f32 %v90, %v354
    %v419 = vsub.f32 %v91, %v355
    %v420 = vsub.f32 %v92, %v356
    %v421 = vsub.f32 %v93, %v357
    %v422 = vsub.f32 %v94, %v358
    %v423 = vmul.f32 %v359, %v359
    %v424 = vmul.f32 %v360, %v360
    %v425 = vmul.f32 %v361, %v361
    %v426 = vmul.f32 %v362, %v362
    %v427 = vmul.f32 %v363, %v363
    %v428 = vmul.f32 %v364, %v364
    %v429 = vmul.f32 %v365, %v365
    %v430 = vmul.f32 %v366, %v366
    %v431 = vmul.f32 %v367, %v367
    %v432 = vmul.f32 %v368, %v368
    %v433 = vmul.f32 %v369, %v369
    %v434 = vmul.f32 %v370, %v370
    %v435 = vmul.f32 %v371, %v371
    %v436 = vmul.f32 %v372, %v372
    %v437 = vmul.f32 %v373, %v373
    %v438 = vmul.f32 %v374, %v374
    %v439 = vmul.f32 %v375, %v375
    %v440 = vmul.f32 %v376, %v376
    %v441 = vmul.f32 %v377, %v377
    %v442 = vmul.f32 %v378, %v378
    %v443 = vmul.f32 %v379, %v379
    %v444 = vmul.f32 %v380, %v380
    %v445 = vmul.f32 %v381, %v381
    %v446 = vmul.f32 %v382, %v382
    %v447 = vmul.f32 %v383, %v383
    %v448 = vmul.f32 %v384, %v384
    %v449 = vmul.f32 %v385, %v385
    %v450 = vmul.f32 %v386, %v386
    %v451 = vmul.f32 %v387, %v387
    %v452 = vmul.f32 %v388, %v388
    %v453 = vmul.f32 %v389, %v389
    %v454 = vmul.f32 %v390, %v390
    %v455 = vmul.f32 %v391, %v391
    %v456 = vmul.f32 %v392, %v392
    %v457 = vmul.f32 %v393, %v393
    %v458 = vmul.f32 %v394, %v394
    %v459 = vmul.f32 %v395, %v395
    %v460 = vmul.f32 %v396, %v396
    %v461 = vmul.f32 %v397, %v397
    %v462 = vmul.f32 %v398, %v398
    %v463 = vmul.f32 %v399, %v399
    %v464 = vmul.f32 %v400, %v400
    %v465 = vmul.f32 %v401, %v401
    %v466 = vmul.f32 %v402, %v402
    %v467 = vmul.f32 %v403, %v403
    %v468 = vmul.f32 %v404, %v404
    %v469 = vmul.f32 %v405, %v405
    %v470 = vmul.f32 %v406, %v406
    %v471 = vmul.f32 %v407, %v407
    %v472 = vmul.f32 %v408, %v408
    %v473 = vmul.f32 %v409, %v409
    %v474 = vmul.f32 %v410, %v410
    %v475 = vmul.f32 %v411, %v411
    %v476 = vmul.f32 %v412, %v412
    %v477 = vmul.f32 %v413, %v413
    %v478 = vmul.f32 %v414, %v414
    %v479 = vmul.f32 %v415, %v415
    %v480 = vmul.f32 %v416, %v416
    %v481 = vmul.f32 %v417, %v417
    %v482 = vmul.f32 %v418, %v418
    %v483 = vmul.f32 %v419, %v419
    %v484 = vmul.f32 %v420, %v420
    %v485 = vmul.f32 %v421, %v421
    %v486 = vmul.f32 %v422, %v422
    %v487 = vsel %vm95, %v423, 0.0
    %488 = vadd.xlane.f32.xlu0 %v487
    %v489 = vpop.xlane.xlu0 %488
    %v490 = vsel %vm95, %v424, 0.0
    %491 = vadd.xlane.f32.xlu0 %v490
    %v492 = vpop.xlane.xlu0 %491
    %v493 = vsel %vm95, %v425, 0.0
    %494 = vadd.xlane.f32.xlu0 %v493
    %v495 = vpop.xlane.xlu0 %494
    %v496 = vsel %vm95, %v426, 0.0
    %497 = vadd.xlane.f32.xlu0 %v496
    %v498 = vpop.xlane.xlu0 %497
    %v499 = vsel %vm95, %v427, 0.0
    %500 = vadd.xlane.f32.xlu0 %v499
    %v501 = vpop.xlane.xlu0 %500
    %v502 = vsel %vm95, %v428, 0.0
    %503 = vadd.xlane.f32.xlu0 %v502
    %v504 = vpop.xlane.xlu0 %503
    %v505 = vsel %vm95, %v429, 0.0
    %506 = vadd.xlane.f32.xlu0 %v505
    %v507 = vpop.xlane.xlu0 %506
    %v508 = vsel %vm95, %v430, 0.0
    %509 = vadd.xlane.f32.xlu0 %v508
    %v510 = vpop.xlane.xlu0 %509
    %v511 = vsel %vm95, %v431, 0.0
    %512 = vadd.xlane.f32.xlu0 %v511
    %v513 = vpop.xlane.xlu0 %512
    %v514 = vsel %vm95, %v432, 0.0
    %515 = vadd.xlane.f32.xlu0 %v514
    %v516 = vpop.xlane.xlu0 %515
    %v517 = vsel %vm95, %v433, 0.0
    %518 = vadd.xlane.f32.xlu0 %v517
    %v519 = vpop.xlane.xlu0 %518
    %v520 = vsel %vm95, %v434, 0.0
    %521 = vadd.xlane.f32.xlu0 %v520
    %v522 = vpop.xlane.xlu0 %521
    %v523 = vsel %vm95, %v435, 0.0
    %524 = vadd.xlane.f32.xlu0 %v523
    %v525 = vpop.xlane.xlu0 %524
    %v526 = vsel %vm95, %v436, 0.0
    %527 = vadd.xlane.f32.xlu0 %v526
    %v528 = vpop.xlane.xlu0 %527
    %v529 = vsel %vm95, %v437, 0.0
    %530 = vadd.xlane.f32.xlu0 %v529
    %v531 = vpop.xlane.xlu0 %530
    %v532 = vsel %vm95, %v438, 0.0
    %533 = vadd.xlane.f32.xlu0 %v532
    %v534 = vpop.xlane.xlu0 %533
    %v535 = vsel %vm95, %v439, 0.0
    %536 = vadd.xlane.f32.xlu0 %v535
    %v537 = vpop.xlane.xlu0 %536
    %v538 = vsel %vm95, %v440, 0.0
    %539 = vadd.xlane.f32.xlu0 %v538
    %v540 = vpop.xlane.xlu0 %539
    %v541 = vsel %vm95, %v441, 0.0
    %542 = vadd.xlane.f32.xlu0 %v541
    %v543 = vpop.xlane.xlu0 %542
    %v544 = vsel %vm95, %v442, 0.0
    %545 = vadd.xlane.f32.xlu0 %v544
    %v546 = vpop.xlane.xlu0 %545
    %v547 = vsel %vm95, %v443, 0.0
    %548 = vadd.xlane.f32.xlu0 %v547
    %v549 = vpop.xlane.xlu0 %548
    %v550 = vsel %vm95, %v444, 0.0
    %551 = vadd.xlane.f32.xlu0 %v550
    %v552 = vpop.xlane.xlu0 %551
    %v553 = vsel %vm95, %v445, 0.0
    %554 = vadd.xlane.f32.xlu0 %v553
    %v555 = vpop.xlane.xlu0 %554
    %v556 = vsel %vm95, %v446, 0.0
    %557 = vadd.xlane.f32.xlu0 %v556
    %v558 = vpop.xlane.xlu0 %557
    %v559 = vsel %vm95, %v447, 0.0
    %560 = vadd.xlane.f32.xlu0 %v559
    %v561 = vpop.xlane.xlu0 %560
    %v562 = vsel %vm95, %v448, 0.0
    %563 = vadd.xlane.f32.xlu0 %v562
    %v564 = vpop.xlane.xlu0 %563
    %v565 = vsel %vm95, %v449, 0.0
    %566 = vadd.xlane.f32.xlu0 %v565
    %v567 = vpop.xlane.xlu0 %566
    %v568 = vsel %vm95, %v450, 0.0
    %569 = vadd.xlane.f32.xlu0 %v568
    %v570 = vpop.xlane.xlu0 %569
    %v571 = vsel %vm95, %v451, 0.0
    %572 = vadd.xlane.f32.xlu0 %v571
    %v573 = vpop.xlane.xlu0 %572
    %v574 = vsel %vm95, %v452, 0.0
    %575 = vadd.xlane.f32.xlu0 %v574
    %v576 = vpop.xlane.xlu0 %575
    %v577 = vsel %vm95, %v453, 0.0
    %578 = vadd.xlane.f32.xlu0 %v577
    %v579 = vpop.xlane.xlu0 %578
    %v580 = vsel %vm95, %v454, 0.0
    %581 = vadd.xlane.f32.xlu0 %v580
    %v582 = vpop.xlane.xlu0 %581
    %v583 = vsel %vm95, %v455, 0.0
    %584 = vadd.xlane.f32.xlu0 %v583
    %v585 = vpop.xlane.xlu0 %584
    %v586 = vsel %vm95, %v456, 0.0
    %587 = vadd.xlane.f32.xlu0 %v586
    %v588 = vpop.xlane.xlu0 %587
    %v589 = vsel %vm95, %v457, 0.0
    %590 = vadd.xlane.f32.xlu0 %v589
    %v591 = vpop.xlane.xlu0 %590
    %v592 = vsel %vm95, %v458, 0.0
    %593 = vadd.xlane.f32.xlu0 %v592
    %v594 = vpop.xlane.xlu0 %593
    %v595 = vsel %vm95, %v459, 0.0
    %596 = vadd.xlane.f32.xlu0 %v595
    %v597 = vpop.xlane.xlu0 %596
    %v598 = vsel %vm95, %v460, 0.0
    %599 = vadd.xlane.f32.xlu0 %v598
    %v600 = vpop.xlane.xlu0 %599
    %v601 = vsel %vm95, %v461, 0.0
    %602 = vadd.xlane.f32.xlu0 %v601
    %v603 = vpop.xlane.xlu0 %602
    %v604 = vsel %vm95, %v462, 0.0
    %605 = vadd.xlane.f32.xlu0 %v604
    %v606 = vpop.xlane.xlu0 %605
    %v607 = vsel %vm95, %v463, 0.0
    %608 = vadd.xlane.f32.xlu0 %v607
    %v609 = vpop.xlane.xlu0 %608
    %v610 = vsel %vm95, %v464, 0.0
    %611 = vadd.xlane.f32.xlu0 %v610
    %v612 = vpop.xlane.xlu0 %611
    %v613 = vsel %vm95, %v465, 0.0
    %614 = vadd.xlane.f32.xlu0 %v613
    %v615 = vpop.xlane.xlu0 %614
    %v616 = vsel %vm95, %v466, 0.0
    %617 = vadd.xlane.f32.xlu0 %v616
    %v618 = vpop.xlane.xlu0 %617
    %v619 = vsel %vm95, %v467, 0.0
    %620 = vadd.xlane.f32.xlu0 %v619
    %v621 = vpop.xlane.xlu0 %620
    %v622 = vsel %vm95, %v468, 0.0
    %623 = vadd.xlane.f32.xlu0 %v622
    %v624 = vpop.xlane.xlu0 %623
    %v625 = vsel %vm95, %v469, 0.0
    %626 = vadd.xlane.f32.xlu0 %v625
    %v627 = vpop.xlane.xlu0 %626
    %v628 = vsel %vm95, %v470, 0.0
    %629 = vadd.xlane.f32.xlu0 %v628
    %v630 = vpop.xlane.xlu0 %629
    %v631 = vsel %vm95, %v471, 0.0
    %632 = vadd.xlane.f32.xlu0 %v631
    %v633 = vpop.xlane.xlu0 %632
    %v634 = vsel %vm95, %v472, 0.0
    %635 = vadd.xlane.f32.xlu0 %v634
    %v636 = vpop.xlane.xlu0 %635
    %v637 = vsel %vm95, %v473, 0.0
    %638 = vadd.xlane.f32.xlu0 %v637
    %v639 = vpop.xlane.xlu0 %638
    %v640 = vsel %vm95, %v474, 0.0
    %641 = vadd.xlane.f32.xlu0 %v640
    %v642 = vpop.xlane.xlu0 %641
    %v643 = vsel %vm95, %v475, 0.0
    %644 = vadd.xlane.f32.xlu0 %v643
    %v645 = vpop.xlane.xlu0 %644
    %v646 = vsel %vm95, %v476, 0.0
    %647 = vadd.xlane.f32.xlu0 %v646
    %v648 = vpop.xlane.xlu0 %647
    %v649 = vsel %vm95, %v477, 0.0
    %650 = vadd.xlane.f32.xlu0 %v649
    %v651 = vpop.xlane.xlu0 %650
    %v652 = vsel %vm95, %v478, 0.0
    %653 = vadd.xlane.f32.xlu0 %v652
    %v654 = vpop.xlane.xlu0 %653
    %v655 = vsel %vm95, %v479, 0.0
    %656 = vadd.xlane.f32.xlu0 %v655
    %v657 = vpop.xlane.xlu0 %656
    %v658 = vsel %vm95, %v480, 0.0
    %659 = vadd.xlane.f32.xlu0 %v658
    %v660 = vpop.xlane.xlu0 %659
    %v661 = vsel %vm95, %v481, 0.0
    %662 = vadd.xlane.f32.xlu0 %v661
    %v663 = vpop.xlane.xlu0 %662
    %v664 = vsel %vm95, %v482, 0.0
    %665 = vadd.xlane.f32.xlu0 %v664
    %v666 = vpop.xlane.xlu0 %665
    %v667 = vsel %vm95, %v483, 0.0
    %668 = vadd.xlane.f32.xlu0 %v667
    %v669 = vpop.xlane.xlu0 %668
    %v670 = vsel %vm95, %v484, 0.0
    %671 = vadd.xlane.f32.xlu0 %v670
    %v672 = vpop.xlane.xlu0 %671
    %v673 = vsel %vm95, %v485, 0.0
    %674 = vadd.xlane.f32.xlu0 %v673
    %v675 = vpop.xlane.xlu0 %674
    %v676 = vsel %vm95, %v486, 0.0
    %677 = vadd.xlane.f32.xlu0 %v676
    %v678 = vpop.xlane.xlu0 %677
    %v679 = vmul.f32 %v489, %v294
    %v680 = vmul.f32 %v492, %v294
    %v681 = vmul.f32 %v495, %v294
    %v682 = vmul.f32 %v498, %v294
    %v683 = vmul.f32 %v501, %v294
    %v684 = vmul.f32 %v504, %v294
    %v685 = vmul.f32 %v507, %v294
    %v686 = vmul.f32 %v510, %v294
    %v687 = vmul.f32 %v513, %v294
    %v688 = vmul.f32 %v516, %v294
    %v689 = vmul.f32 %v519, %v294
    %v690 = vmul.f32 %v522, %v294
    %v691 = vmul.f32 %v525, %v294
    %v692 = vmul.f32 %v528, %v294
    %v693 = vmul.f32 %v531, %v294
    %v694 = vmul.f32 %v534, %v294
    %v695 = vmul.f32 %v537, %v294
    %v696 = vmul.f32 %v540, %v294
    %v697 = vmul.f32 %v543, %v294
    %v698 = vmul.f32 %v546, %v294
    %v699 = vmul.f32 %v549, %v294
    %v700 = vmul.f32 %v552, %v294
    %v701 = vmul.f32 %v555, %v294
    %v702 = vmul.f32 %v558, %v294
    %v703 = vmul.f32 %v561, %v294
    %v704 = vmul.f32 %v564, %v294
    %v705 = vmul.f32 %v567, %v294
    %v706 = vmul.f32 %v570, %v294
    %v707 = vmul.f32 %v573, %v294
    %v708 = vmul.f32 %v576, %v294
    %v709 = vmul.f32 %v579, %v294
    %v710 = vmul.f32 %v582, %v294
    %v711 = vmul.f32 %v585, %v294
    %v712 = vmul.f32 %v588, %v294
    %v713 = vmul.f32 %v591, %v294
    %v714 = vmul.f32 %v594, %v294
    %v715 = vmul.f32 %v597, %v294
    %v716 = vmul.f32 %v600, %v294
    %v717 = vmul.f32 %v603, %v294
    %v718 = vmul.f32 %v606, %v294
    %v719 = vmul.f32 %v609, %v294
    %v720 = vmul.f32 %v612, %v294
    %v721 = vmul.f32 %v615, %v294
    %v722 = vmul.f32 %v618, %v294
    %v723 = vmul.f32 %v621, %v294
    %v724 = vmul.f32 %v624, %v294
    %v725 = vmul.f32 %v627, %v294
    %v726 = vmul.f32 %v630, %v294
    %v727 = vmul.f32 %v633, %v294
    %v728 = vmul.f32 %v636, %v294
    %v729 = vmul.f32 %v639, %v294
    %v730 = vmul.f32 %v642, %v294
    %v731 = vmul.f32 %v645, %v294
    %v732 = vmul.f32 %v648, %v294
    %v733 = vmul.f32 %v651, %v294
    %v734 = vmul.f32 %v654, %v294
    %v735 = vmul.f32 %v657, %v294
    %v736 = vmul.f32 %v660, %v294
    %v737 = vmul.f32 %v663, %v294
    %v738 = vmul.f32 %v666, %v294
    %v739 = vmul.f32 %v669, %v294
    %v740 = vmul.f32 %v672, %v294
    %v741 = vmul.f32 %v675, %v294
    %v742 = vmul.f32 %v678, %v294
    %v743 = vadd.f32 %v679, 1e-05
    %v744 = vadd.f32 %v680, 1e-05
    %v745 = vadd.f32 %v681, 1e-05
    %v746 = vadd.f32 %v682, 1e-05
    %v747 = vadd.f32 %v683, 1e-05
    %v748 = vadd.f32 %v684, 1e-05
    %v749 = vadd.f32 %v685, 1e-05
    %v750 = vadd.f32 %v686, 1e-05
    %v751 = vadd.f32 %v687, 1e-05
    %v752 = vadd.f32 %v688, 1e-05
    %v753 = vadd.f32 %v689, 1e-05
    %v754 = vadd.f32 %v690, 1e-05
    %v755 = vadd.f32 %v691, 1e-05
    %v756 = vadd.f32 %v692, 1e-05
    %v757 = vadd.f32 %v693, 1e-05
    %v758 = vadd.f32 %v694, 1e-05
    %v759 = vadd.f32 %v695, 1e-05
    %v760 = vadd.f32 %v696, 1e-05
    %v761 = vadd.f32 %v697, 1e-05
    %v762 = vadd.f32 %v698, 1e-05
    %v763 = vadd.f32 %v699, 1e-05
    %v764 = vadd.f32 %v700, 1e-05
    %v765 = vadd.f32 %v701, 1e-05
    %v766 = vadd.f32 %v702, 1e-05
    %v767 = vadd.f32 %v703, 1e-05
    %v768 = vadd.f32 %v704, 1e-05
    %v769 = vadd.f32 %v705, 1e-05
    %v770 = vadd.f32 %v706, 1e-05
    %v771 = vadd.f32 %v707, 1e-05
    %v772 = vadd.f32 %v708, 1e-05
    %v773 = vadd.f32 %v709, 1e-05
    %v774 = vadd.f32 %v710, 1e-05
    %v775 = vadd.f32 %v711, 1e-05
    %v776 = vadd.f32 %v712, 1e-05
    %v777 = vadd.f32 %v713, 1e-05
    %v778 = vadd.f32 %v714, 1e-05
    %v779 = vadd.f32 %v715, 1e-05
    %v780 = vadd.f32 %v716, 1e-05
    %v781 = vadd.f32 %v717, 1e-05
    %v782 = vadd.f32 %v718, 1e-05
    %v783 = vadd.f32 %v719, 1e-05
    %v784 = vadd.f32 %v720, 1e-05
    %v785 = vadd.f32 %v721, 1e-05
    %v786 = vadd.f32 %v722, 1e-05
    %v787 = vadd.f32 %v723, 1e-05
    %v788 = vadd.f32 %v724, 1e-05
    %v789 = vadd.f32 %v725, 1e-05
    %v790 = vadd.f32 %v726, 1e-05
    %v791 = vadd.f32 %v727, 1e-05
    %v792 = vadd.f32 %v728, 1e-05
    %v793 = vadd.f32 %v729, 1e-05
    %v794 = vadd.f32 %v730, 1e-05
    %v795 = vadd.f32 %v731, 1e-05
    %v796 = vadd.f32 %v732, 1e-05
    %v797 = vadd.f32 %v733, 1e-05
    %v798 = vadd.f32 %v734, 1e-05
    %v799 = vadd.f32 %v735, 1e-05
    %v800 = vadd.f32 %v736, 1e-05
    %v801 = vadd.f32 %v737, 1e-05
    %v802 = vadd.f32 %v738, 1e-05
    %v803 = vadd.f32 %v739, 1e-05
    %v804 = vadd.f32 %v740, 1e-05
    %v805 = vadd.f32 %v741, 1e-05
    %v806 = vadd.f32 %v742, 1e-05
    %v807 = vrsqrt.pop %v743
    %v808 = vmul.f32 %v807, %v743
    %v809 = vmul.f32 %v808, %v807
    %v810 = vmul.f32 0.5, %v809
    %v811 = vsub.f32 1.5, %v810
    %v812 = vmul.f32 %v807, %v811
    %vm813 = vweird.f32 %v743
    %vm814 = vweird.f32 %v807
    %vm815 = vmor %vm813, %vm814
    %v816 = vsel %vm815, %v807, %v812
    %v817 = vrsqrt.pop %v744
    %v818 = vmul.f32 %v817, %v744
    %v819 = vmul.f32 %v818, %v817
    %v820 = vmul.f32 0.5, %v819
    %v821 = vsub.f32 1.5, %v820
    %v822 = vmul.f32 %v817, %v821
    %vm823 = vweird.f32 %v744
    %vm824 = vweird.f32 %v817
    %vm825 = vmor %vm823, %vm824
    %v826 = vsel %vm825, %v817, %v822
    %v827 = vrsqrt.pop %v745
    %v828 = vmul.f32 %v827, %v745
    %v829 = vmul.f32 %v828, %v827
    %v830 = vmul.f32 0.5, %v829
    %v831 = vsub.f32 1.5, %v830
    %v832 = vmul.f32 %v827, %v831
    %vm833 = vweird.f32 %v745
    %vm834 = vweird.f32 %v827
    %vm835 = vmor %vm833, %vm834
    %v836 = vsel %vm835, %v827, %v832
    %v837 = vrsqrt.pop %v746
    %v838 = vmul.f32 %v837, %v746
    %v839 = vmul.f32 %v838, %v837
    %v840 = vmul.f32 0.5, %v839
    %v841 = vsub.f32 1.5, %v840
    %v842 = vmul.f32 %v837, %v841
    %vm843 = vweird.f32 %v746
    %vm844 = vweird.f32 %v837
    %vm845 = vmor %vm843, %vm844
    %v846 = vsel %vm845, %v837, %v842
    %v847 = vrsqrt.pop %v747
    %v848 = vmul.f32 %v847, %v747
    %v849 = vmul.f32 %v848, %v847
    %v850 = vmul.f32 0.5, %v849
    %v851 = vsub.f32 1.5, %v850
    %v852 = vmul.f32 %v847, %v851
    %vm853 = vweird.f32 %v747
    %vm854 = vweird.f32 %v847
    %vm855 = vmor %vm853, %vm854
    %v856 = vsel %vm855, %v847, %v852
    %v857 = vrsqrt.pop %v748
    %v858 = vmul.f32 %v857, %v748
    %v859 = vmul.f32 %v858, %v857
    %v860 = vmul.f32 0.5, %v859
    %v861 = vsub.f32 1.5, %v860
    %v862 = vmul.f32 %v857, %v861
    %vm863 = vweird.f32 %v748
    %vm864 = vweird.f32 %v857
    %vm865 = vmor %vm863, %vm864
    %v866 = vsel %vm865, %v857, %v862
    %v867 = vrsqrt.pop %v749
    %v868 = vmul.f32 %v867, %v749
    %v869 = vmul.f32 %v868, %v867
    %v870 = vmul.f32 0.5, %v869
    %v871 = vsub.f32 1.5, %v870
    %v872 = vmul.f32 %v867, %v871
    %vm873 = vweird.f32 %v749
    %vm874 = vweird.f32 %v867
    %vm875 = vmor %vm873, %vm874
    %v876 = vsel %vm875, %v867, %v872
    %v877 = vrsqrt.pop %v750
    %v878 = vmul.f32 %v877, %v750
    %v879 = vmul.f32 %v878, %v877
    %v880 = vmul.f32 0.5, %v879
    %v881 = vsub.f32 1.5, %v880
    %v882 = vmul.f32 %v877, %v881
    %vm883 = vweird.f32 %v750
    %vm884 = vweird.f32 %v877
    %vm885 = vmor %vm883, %vm884
    %v886 = vsel %vm885, %v877, %v882
    %v887 = vrsqrt.pop %v751
    %v888 = vmul.f32 %v887, %v751
    %v889 = vmul.f32 %v888, %v887
    %v890 = vmul.f32 0.5, %v889
    %v891 = vsub.f32 1.5, %v890
    %v892 = vmul.f32 %v887, %v891
    %vm893 = vweird.f32 %v751
    %vm894 = vweird.f32 %v887
    %vm895 = vmor %vm893, %vm894
    %v896 = vsel %vm895, %v887, %v892
    %v897 = vrsqrt.pop %v752
    %v898 = vmul.f32 %v897, %v752
    %v899 = vmul.f32 %v898, %v897
    %v900 = vmul.f32 0.5, %v899
    %v901 = vsub.f32 1.5, %v900
    %v902 = vmul.f32 %v897, %v901
    %vm903 = vweird.f32 %v752
    %vm904 = vweird.f32 %v897
    %vm905 = vmor %vm903, %vm904
    %v906 = vsel %vm905, %v897, %v902
    %v907 = vrsqrt.pop %v753
    %v908 = vmul.f32 %v907, %v753
    %v909 = vmul.f32 %v908, %v907
    %v910 = vmul.f32 0.5, %v909
    %v911 = vsub.f32 1.5, %v910
    %v912 = vmul.f32 %v907, %v911
    %vm913 = vweird.f32 %v753
    %vm914 = vweird.f32 %v907
    %vm915 = vmor %vm913, %vm914
    %v916 = vsel %vm915, %v907, %v912
    %v917 = vrsqrt.pop %v754
    %v918 = vmul.f32 %v917, %v754
    %v919 = vmul.f32 %v918, %v917
    %v920 = vmul.f32 0.5, %v919
    %v921 = vsub.f32 1.5, %v920
    %v922 = vmul.f32 %v917, %v921
    %vm923 = vweird.f32 %v754
    %vm924 = vweird.f32 %v917
    %vm925 = vmor %vm923, %vm924
    %v926 = vsel %vm925, %v917, %v922
    %v927 = vrsqrt.pop %v755
    %v928 = vmul.f32 %v927, %v755
    %v929 = vmul.f32 %v928, %v927
    %v930 = vmul.f32 0.5, %v929
    %v931 = vsub.f32 1.5, %v930
    %v932 = vmul.f32 %v927, %v931
    %vm933 = vweird.f32 %v755
    %vm934 = vweird.f32 %v927
    %vm935 = vmor %vm933, %vm934
    %v936 = vsel %vm935, %v927, %v932
    %v937 = vrsqrt.pop %v756
    %v938 = vmul.f32 %v937, %v756
    %v939 = vmul.f32 %v938, %v937
    %v940 = vmul.f32 0.5, %v939
    %v941 = vsub.f32 1.5, %v940
    %v942 = vmul.f32 %v937, %v941
    %vm943 = vweird.f32 %v756
    %vm944 = vweird.f32 %v937
    %vm945 = vmor %vm943, %vm944
    %v946 = vsel %vm945, %v937, %v942
    %v947 = vrsqrt.pop %v757
    %v948 = vmul.f32 %v947, %v757
    %v949 = vmul.f32 %v948, %v947
    %v950 = vmul.f32 0.5, %v949
    %v951 = vsub.f32 1.5, %v950
    %v952 = vmul.f32 %v947, %v951
    %vm953 = vweird.f32 %v757
    %vm954 = vweird.f32 %v947
    %vm955 = vmor %vm953, %vm954
    %v956 = vsel %vm955, %v947, %v952
    %v957 = vrsqrt.pop %v758
    %v958 = vmul.f32 %v957, %v758
    %v959 = vmul.f32 %v958, %v957
    %v960 = vmul.f32 0.5, %v959
    %v961 = vsub.f32 1.5, %v960
    %v962 = vmul.f32 %v957, %v961
    %vm963 = vweird.f32 %v758
    %vm964 = vweird.f32 %v957
    %vm965 = vmor %vm963, %vm964
    %v966 = vsel %vm965, %v957, %v962
    %v967 = vrsqrt.pop %v759
    %v968 = vmul.f32 %v967, %v759
    %v969 = vmul.f32 %v968, %v967
    %v970 = vmul.f32 0.5, %v969
    %v971 = vsub.f32 1.5, %v970
    %v972 = vmul.f32 %v967, %v971
    %vm973 = vweird.f32 %v759
    %vm974 = vweird.f32 %v967
    %vm975 = vmor %vm973, %vm974
    %v976 = vsel %vm975, %v967, %v972
    %v977 = vrsqrt.pop %v760
    %v978 = vmul.f32 %v977, %v760
    %v979 = vmul.f32 %v978, %v977
    %v980 = vmul.f32 0.5, %v979
    %v981 = vsub.f32 1.5, %v980
    %v982 = vmul.f32 %v977, %v981
    %vm983 = vweird.f32 %v760
    %vm984 = vweird.f32 %v977
    %vm985 = vmor %vm983, %vm984
    %v986 = vsel %vm985, %v977, %v982
    %v987 = vrsqrt.pop %v761
    %v988 = vmul.f32 %v987, %v761
    %v989 = vmul.f32 %v988, %v987
    %v990 = vmul.f32 0.5, %v989
    %v991 = vsub.f32 1.5, %v990
    %v992 = vmul.f32 %v987, %v991
    %vm993 = vweird.f32 %v761
    %vm994 = vweird.f32 %v987
    %vm995 = vmor %vm993, %vm994
    %v996 = vsel %vm995, %v987, %v992
    %v997 = vrsqrt.pop %v762
    %v998 = vmul.f32 %v997, %v762
    %v999 = vmul.f32 %v998, %v997
    %v1000 = vmul.f32 0.5, %v999
    %v1001 = vsub.f32 1.5, %v1000
    %v1002 = vmul.f32 %v997, %v1001
    %vm1003 = vweird.f32 %v762
    %vm1004 = vweird.f32 %v997
    %vm1005 = vmor %vm1003, %vm1004
    %v1006 = vsel %vm1005, %v997, %v1002
    %v1007 = vrsqrt.pop %v763
    %v1008 = vmul.f32 %v1007, %v763
    %v1009 = vmul.f32 %v1008, %v1007
    %v1010 = vmul.f32 0.5, %v1009
    %v1011 = vsub.f32 1.5, %v1010
    %v1012 = vmul.f32 %v1007, %v1011
    %vm1013 = vweird.f32 %v763
    %vm1014 = vweird.f32 %v1007
    %vm1015 = vmor %vm1013, %vm1014
    %v1016 = vsel %vm1015, %v1007, %v1012
    %v1017 = vrsqrt.pop %v764
    %v1018 = vmul.f32 %v1017, %v764
    %v1019 = vmul.f32 %v1018, %v1017
    %v1020 = vmul.f32 0.5, %v1019
    %v1021 = vsub.f32 1.5, %v1020
    %v1022 = vmul.f32 %v1017, %v1021
    %vm1023 = vweird.f32 %v764
    %vm1024 = vweird.f32 %v1017
    %vm1025 = vmor %vm1023, %vm1024
    %v1026 = vsel %vm1025, %v1017, %v1022
    %v1027 = vrsqrt.pop %v765
    %v1028 = vmul.f32 %v1027, %v765
    %v1029 = vmul.f32 %v1028, %v1027
    %v1030 = vmul.f32 0.5, %v1029
    %v1031 = vsub.f32 1.5, %v1030
    %v1032 = vmul.f32 %v1027, %v1031
    %vm1033 = vweird.f32 %v765
    %vm1034 = vweird.f32 %v1027
    %vm1035 = vmor %vm1033, %vm1034
    %v1036 = vsel %vm1035, %v1027, %v1032
    %v1037 = vrsqrt.pop %v766
    %v1038 = vmul.f32 %v1037, %v766
    %v1039 = vmul.f32 %v1038, %v1037
    %v1040 = vmul.f32 0.5, %v1039
    %v1041 = vsub.f32 1.5, %v1040
    %v1042 = vmul.f32 %v1037, %v1041
    %vm1043 = vweird.f32 %v766
    %vm1044 = vweird.f32 %v1037
    %vm1045 = vmor %vm1043, %vm1044
    %v1046 = vsel %vm1045, %v1037, %v1042
    %v1047 = vrsqrt.pop %v767
    %v1048 = vmul.f32 %v1047, %v767
    %v1049 = vmul.f32 %v1048, %v1047
    %v1050 = vmul.f32 0.5, %v1049
    %v1051 = vsub.f32 1.5, %v1050
    %v1052 = vmul.f32 %v1047, %v1051
    %vm1053 = vweird.f32 %v767
    %vm1054 = vweird.f32 %v1047
    %vm1055 = vmor %vm1053, %vm1054
    %v1056 = vsel %vm1055, %v1047, %v1052
    %v1057 = vrsqrt.pop %v768
    %v1058 = vmul.f32 %v1057, %v768
    %v1059 = vmul.f32 %v1058, %v1057
    %v1060 = vmul.f32 0.5, %v1059
    %v1061 = vsub.f32 1.5, %v1060
    %v1062 = vmul.f32 %v1057, %v1061
    %vm1063 = vweird.f32 %v768
    %vm1064 = vweird.f32 %v1057
    %vm1065 = vmor %vm1063, %vm1064
    %v1066 = vsel %vm1065, %v1057, %v1062
    %v1067 = vrsqrt.pop %v769
    %v1068 = vmul.f32 %v1067, %v769
    %v1069 = vmul.f32 %v1068, %v1067
    %v1070 = vmul.f32 0.5, %v1069
    %v1071 = vsub.f32 1.5, %v1070
    %v1072 = vmul.f32 %v1067, %v1071
    %vm1073 = vweird.f32 %v769
    %vm1074 = vweird.f32 %v1067
    %vm1075 = vmor %vm1073, %vm1074
    %v1076 = vsel %vm1075, %v1067, %v1072
    %v1077 = vrsqrt.pop %v770
    %v1078 = vmul.f32 %v1077, %v770
    %v1079 = vmul.f32 %v1078, %v1077
    %v1080 = vmul.f32 0.5, %v1079
    %v1081 = vsub.f32 1.5, %v1080
    %v1082 = vmul.f32 %v1077, %v1081
    %vm1083 = vweird.f32 %v770
    %vm1084 = vweird.f32 %v1077
    %vm1085 = vmor %vm1083, %vm1084
    %v1086 = vsel %vm1085, %v1077, %v1082
    %v1087 = vrsqrt.pop %v771
    %v1088 = vmul.f32 %v1087, %v771
    %v1089 = vmul.f32 %v1088, %v1087
    %v1090 = vmul.f32 0.5, %v1089
    %v1091 = vsub.f32 1.5, %v1090
    %v1092 = vmul.f32 %v1087, %v1091
    %vm1093 = vweird.f32 %v771
    %vm1094 = vweird.f32 %v1087
    %vm1095 = vmor %vm1093, %vm1094
    %v1096 = vsel %vm1095, %v1087, %v1092
    %v1097 = vrsqrt.pop %v772
    %v1098 = vmul.f32 %v1097, %v772
    %v1099 = vmul.f32 %v1098, %v1097
    %v1100 = vmul.f32 0.5, %v1099
    %v1101 = vsub.f32 1.5, %v1100
    %v1102 = vmul.f32 %v1097, %v1101
    %vm1103 = vweird.f32 %v772
    %vm1104 = vweird.f32 %v1097
    %vm1105 = vmor %vm1103, %vm1104
    %v1106 = vsel %vm1105, %v1097, %v1102
    %v1107 = vrsqrt.pop %v773
    %v1108 = vmul.f32 %v1107, %v773
    %v1109 = vmul.f32 %v1108, %v1107
    %v1110 = vmul.f32 0.5, %v1109
    %v1111 = vsub.f32 1.5, %v1110
    %v1112 = vmul.f32 %v1107, %v1111
    %vm1113 = vweird.f32 %v773
    %vm1114 = vweird.f32 %v1107
    %vm1115 = vmor %vm1113, %vm1114
    %v1116 = vsel %vm1115, %v1107, %v1112
    %v1117 = vrsqrt.pop %v774
    %v1118 = vmul.f32 %v1117, %v774
    %v1119 = vmul.f32 %v1118, %v1117
    %v1120 = vmul.f32 0.5, %v1119
    %v1121 = vsub.f32 1.5, %v1120
    %v1122 = vmul.f32 %v1117, %v1121
    %vm1123 = vweird.f32 %v774
    %vm1124 = vweird.f32 %v1117
    %vm1125 = vmor %vm1123, %vm1124
    %v1126 = vsel %vm1125, %v1117, %v1122
    %v1127 = vrsqrt.pop %v775
    %v1128 = vmul.f32 %v1127, %v775
    %v1129 = vmul.f32 %v1128, %v1127
    %v1130 = vmul.f32 0.5, %v1129
    %v1131 = vsub.f32 1.5, %v1130
    %v1132 = vmul.f32 %v1127, %v1131
    %vm1133 = vweird.f32 %v775
    %vm1134 = vweird.f32 %v1127
    %vm1135 = vmor %vm1133, %vm1134
    %v1136 = vsel %vm1135, %v1127, %v1132
    %v1137 = vrsqrt.pop %v776
    %v1138 = vmul.f32 %v1137, %v776
    %v1139 = vmul.f32 %v1138, %v1137
    %v1140 = vmul.f32 0.5, %v1139
    %v1141 = vsub.f32 1.5, %v1140
    %v1142 = vmul.f32 %v1137, %v1141
    %vm1143 = vweird.f32 %v776
    %vm1144 = vweird.f32 %v1137
    %vm1145 = vmor %vm1143, %vm1144
    %v1146 = vsel %vm1145, %v1137, %v1142
    %v1147 = vrsqrt.pop %v777
    %v1148 = vmul.f32 %v1147, %v777
    %v1149 = vmul.f32 %v1148, %v1147
    %v1150 = vmul.f32 0.5, %v1149
    %v1151 = vsub.f32 1.5, %v1150
    %v1152 = vmul.f32 %v1147, %v1151
    %vm1153 = vweird.f32 %v777
    %vm1154 = vweird.f32 %v1147
    %vm1155 = vmor %vm1153, %vm1154
    %v1156 = vsel %vm1155, %v1147, %v1152
    %v1157 = vrsqrt.pop %v778
    %v1158 = vmul.f32 %v1157, %v778
    %v1159 = vmul.f32 %v1158, %v1157
    %v1160 = vmul.f32 0.5, %v1159
    %v1161 = vsub.f32 1.5, %v1160
    %v1162 = vmul.f32 %v1157, %v1161
    %vm1163 = vweird.f32 %v778
    %vm1164 = vweird.f32 %v1157
    %vm1165 = vmor %vm1163, %vm1164
    %v1166 = vsel %vm1165, %v1157, %v1162
    %v1167 = vrsqrt.pop %v779
    %v1168 = vmul.f32 %v1167, %v779
    %v1169 = vmul.f32 %v1168, %v1167
    %v1170 = vmul.f32 0.5, %v1169
    %v1171 = vsub.f32 1.5, %v1170
    %v1172 = vmul.f32 %v1167, %v1171
    %vm1173 = vweird.f32 %v779
    %vm1174 = vweird.f32 %v1167
    %vm1175 = vmor %vm1173, %vm1174
    %v1176 = vsel %vm1175, %v1167, %v1172
    %v1177 = vrsqrt.pop %v780
    %v1178 = vmul.f32 %v1177, %v780
    %v1179 = vmul.f32 %v1178, %v1177
    %v1180 = vmul.f32 0.5, %v1179
    %v1181 = vsub.f32 1.5, %v1180
    %v1182 = vmul.f32 %v1177, %v1181
    %vm1183 = vweird.f32 %v780
    %vm1184 = vweird.f32 %v1177
    %vm1185 = vmor %vm1183, %vm1184
    %v1186 = vsel %vm1185, %v1177, %v1182
    %v1187 = vrsqrt.pop %v781
    %v1188 = vmul.f32 %v1187, %v781
    %v1189 = vmul.f32 %v1188, %v1187
    %v1190 = vmul.f32 0.5, %v1189
    %v1191 = vsub.f32 1.5, %v1190
    %v1192 = vmul.f32 %v1187, %v1191
    %vm1193 = vweird.f32 %v781
    %vm1194 = vweird.f32 %v1187
    %vm1195 = vmor %vm1193, %vm1194
    %v1196 = vsel %vm1195, %v1187, %v1192
    %v1197 = vrsqrt.pop %v782
    %v1198 = vmul.f32 %v1197, %v782
    %v1199 = vmul.f32 %v1198, %v1197
    %v1200 = vmul.f32 0.5, %v1199
    %v1201 = vsub.f32 1.5, %v1200
    %v1202 = vmul.f32 %v1197, %v1201
    %vm1203 = vweird.f32 %v782
    %vm1204 = vweird.f32 %v1197
    %vm1205 = vmor %vm1203, %vm1204
    %v1206 = vsel %vm1205, %v1197, %v1202
    %v1207 = vrsqrt.pop %v783
    %v1208 = vmul.f32 %v1207, %v783
    %v1209 = vmul.f32 %v1208, %v1207
    %v1210 = vmul.f32 0.5, %v1209
    %v1211 = vsub.f32 1.5, %v1210
    %v1212 = vmul.f32 %v1207, %v1211
    %vm1213 = vweird.f32 %v783
    %vm1214 = vweird.f32 %v1207
    %vm1215 = vmor %vm1213, %vm1214
    %v1216 = vsel %vm1215, %v1207, %v1212
    %v1217 = vrsqrt.pop %v784
    %v1218 = vmul.f32 %v1217, %v784
    %v1219 = vmul.f32 %v1218, %v1217
    %v1220 = vmul.f32 0.5, %v1219
    %v1221 = vsub.f32 1.5, %v1220
    %v1222 = vmul.f32 %v1217, %v1221
    %vm1223 = vweird.f32 %v784
    %vm1224 = vweird.f32 %v1217
    %vm1225 = vmor %vm1223, %vm1224
    %v1226 = vsel %vm1225, %v1217, %v1222
    %v1227 = vrsqrt.pop %v785
    %v1228 = vmul.f32 %v1227, %v785
    %v1229 = vmul.f32 %v1228, %v1227
    %v1230 = vmul.f32 0.5, %v1229
    %v1231 = vsub.f32 1.5, %v1230
    %v1232 = vmul.f32 %v1227, %v1231
    %vm1233 = vweird.f32 %v785
    %vm1234 = vweird.f32 %v1227
    %vm1235 = vmor %vm1233, %vm1234
    %v1236 = vsel %vm1235, %v1227, %v1232
    %v1237 = vrsqrt.pop %v786
    %v1238 = vmul.f32 %v1237, %v786
    %v1239 = vmul.f32 %v1238, %v1237
    %v1240 = vmul.f32 0.5, %v1239
    %v1241 = vsub.f32 1.5, %v1240
    %v1242 = vmul.f32 %v1237, %v1241
    %vm1243 = vweird.f32 %v786
    %vm1244 = vweird.f32 %v1237
    %vm1245 = vmor %vm1243, %vm1244
    %v1246 = vsel %vm1245, %v1237, %v1242
    %v1247 = vrsqrt.pop %v787
    %v1248 = vmul.f32 %v1247, %v787
    %v1249 = vmul.f32 %v1248, %v1247
    %v1250 = vmul.f32 0.5, %v1249
    %v1251 = vsub.f32 1.5, %v1250
    %v1252 = vmul.f32 %v1247, %v1251
    %vm1253 = vweird.f32 %v787
    %vm1254 = vweird.f32 %v1247
    %vm1255 = vmor %vm1253, %vm1254
    %v1256 = vsel %vm1255, %v1247, %v1252
    %v1257 = vrsqrt.pop %v788
    %v1258 = vmul.f32 %v1257, %v788
    %v1259 = vmul.f32 %v1258, %v1257
    %v1260 = vmul.f32 0.5, %v1259
    %v1261 = vsub.f32 1.5, %v1260
    %v1262 = vmul.f32 %v1257, %v1261
    %vm1263 = vweird.f32 %v788
    %vm1264 = vweird.f32 %v1257
    %vm1265 = vmor %vm1263, %vm1264
    %v1266 = vsel %vm1265, %v1257, %v1262
    %v1267 = vrsqrt.pop %v789
    %v1268 = vmul.f32 %v1267, %v789
    %v1269 = vmul.f32 %v1268, %v1267
    %v1270 = vmul.f32 0.5, %v1269
    %v1271 = vsub.f32 1.5, %v1270
    %v1272 = vmul.f32 %v1267, %v1271
    %vm1273 = vweird.f32 %v789
    %vm1274 = vweird.f32 %v1267
    %vm1275 = vmor %vm1273, %vm1274
    %v1276 = vsel %vm1275, %v1267, %v1272
    %v1277 = vrsqrt.pop %v790
    %v1278 = vmul.f32 %v1277, %v790
    %v1279 = vmul.f32 %v1278, %v1277
    %v1280 = vmul.f32 0.5, %v1279
    %v1281 = vsub.f32 1.5, %v1280
    %v1282 = vmul.f32 %v1277, %v1281
    %vm1283 = vweird.f32 %v790
    %vm1284 = vweird.f32 %v1277
    %vm1285 = vmor %vm1283, %vm1284
    %v1286 = vsel %vm1285, %v1277, %v1282
    %v1287 = vrsqrt.pop %v791
    %v1288 = vmul.f32 %v1287, %v791
    %v1289 = vmul.f32 %v1288, %v1287
    %v1290 = vmul.f32 0.5, %v1289
    %v1291 = vsub.f32 1.5, %v1290
    %v1292 = vmul.f32 %v1287, %v1291
    %vm1293 = vweird.f32 %v791
    %vm1294 = vweird.f32 %v1287
    %vm1295 = vmor %vm1293, %vm1294
    %v1296 = vsel %vm1295, %v1287, %v1292
    %v1297 = vrsqrt.pop %v792
    %v1298 = vmul.f32 %v1297, %v792
    %v1299 = vmul.f32 %v1298, %v1297
    %v1300 = vmul.f32 0.5, %v1299
    %v1301 = vsub.f32 1.5, %v1300
    %v1302 = vmul.f32 %v1297, %v1301
    %vm1303 = vweird.f32 %v792
    %vm1304 = vweird.f32 %v1297
    %vm1305 = vmor %vm1303, %vm1304
    %v1306 = vsel %vm1305, %v1297, %v1302
    %v1307 = vrsqrt.pop %v793
    %v1308 = vmul.f32 %v1307, %v793
    %v1309 = vmul.f32 %v1308, %v1307
    %v1310 = vmul.f32 0.5, %v1309
    %v1311 = vsub.f32 1.5, %v1310
    %v1312 = vmul.f32 %v1307, %v1311
    %vm1313 = vweird.f32 %v793
    %vm1314 = vweird.f32 %v1307
    %vm1315 = vmor %vm1313, %vm1314
    %v1316 = vsel %vm1315, %v1307, %v1312
    %v1317 = vrsqrt.pop %v794
    %v1318 = vmul.f32 %v1317, %v794
    %v1319 = vmul.f32 %v1318, %v1317
    %v1320 = vmul.f32 0.5, %v1319
    %v1321 = vsub.f32 1.5, %v1320
    %v1322 = vmul.f32 %v1317, %v1321
    %vm1323 = vweird.f32 %v794
    %vm1324 = vweird.f32 %v1317
    %vm1325 = vmor %vm1323, %vm1324
    %v1326 = vsel %vm1325, %v1317, %v1322
    %v1327 = vrsqrt.pop %v795
    %v1328 = vmul.f32 %v1327, %v795
    %v1329 = vmul.f32 %v1328, %v1327
    %v1330 = vmul.f32 0.5, %v1329
    %v1331 = vsub.f32 1.5, %v1330
    %v1332 = vmul.f32 %v1327, %v1331
    %vm1333 = vweird.f32 %v795
    %vm1334 = vweird.f32 %v1327
    %vm1335 = vmor %vm1333, %vm1334
    %v1336 = vsel %vm1335, %v1327, %v1332
    %v1337 = vrsqrt.pop %v796
    %v1338 = vmul.f32 %v1337, %v796
    %v1339 = vmul.f32 %v1338, %v1337
    %v1340 = vmul.f32 0.5, %v1339
    %v1341 = vsub.f32 1.5, %v1340
    %v1342 = vmul.f32 %v1337, %v1341
    %vm1343 = vweird.f32 %v796
    %vm1344 = vweird.f32 %v1337
    %vm1345 = vmor %vm1343, %vm1344
    %v1346 = vsel %vm1345, %v1337, %v1342
    %v1347 = vrsqrt.pop %v797
    %v1348 = vmul.f32 %v1347, %v797
    %v1349 = vmul.f32 %v1348, %v1347
    %v1350 = vmul.f32 0.5, %v1349
    %v1351 = vsub.f32 1.5, %v1350
    %v1352 = vmul.f32 %v1347, %v1351
    %vm1353 = vweird.f32 %v797
    %vm1354 = vweird.f32 %v1347
    %vm1355 = vmor %vm1353, %vm1354
    %v1356 = vsel %vm1355, %v1347, %v1352
    %v1357 = vrsqrt.pop %v798
    %v1358 = vmul.f32 %v1357, %v798
    %v1359 = vmul.f32 %v1358, %v1357
    %v1360 = vmul.f32 0.5, %v1359
    %v1361 = vsub.f32 1.5, %v1360
    %v1362 = vmul.f32 %v1357, %v1361
    %vm1363 = vweird.f32 %v798
    %vm1364 = vweird.f32 %v1357
    %vm1365 = vmor %vm1363, %vm1364
    %v1366 = vsel %vm1365, %v1357, %v1362
    %v1367 = vrsqrt.pop %v799
    %v1368 = vmul.f32 %v1367, %v799
    %v1369 = vmul.f32 %v1368, %v1367
    %v1370 = vmul.f32 0.5, %v1369
    %v1371 = vsub.f32 1.5, %v1370
    %v1372 = vmul.f32 %v1367, %v1371
    %vm1373 = vweird.f32 %v799
    %vm1374 = vweird.f32 %v1367
    %vm1375 = vmor %vm1373, %vm1374
    %v1376 = vsel %vm1375, %v1367, %v1372
    %v1377 = vrsqrt.pop %v800
    %v1378 = vmul.f32 %v1377, %v800
    %v1379 = vmul.f32 %v1378, %v1377
    %v1380 = vmul.f32 0.5, %v1379
    %v1381 = vsub.f32 1.5, %v1380
    %v1382 = vmul.f32 %v1377, %v1381
    %vm1383 = vweird.f32 %v800
    %vm1384 = vweird.f32 %v1377
    %vm1385 = vmor %vm1383, %vm1384
    %v1386 = vsel %vm1385, %v1377, %v1382
    %v1387 = vrsqrt.pop %v801
    %v1388 = vmul.f32 %v1387, %v801
    %v1389 = vmul.f32 %v1388, %v1387
    %v1390 = vmul.f32 0.5, %v1389
    %v1391 = vsub.f32 1.5, %v1390
    %v1392 = vmul.f32 %v1387, %v1391
    %vm1393 = vweird.f32 %v801
    %vm1394 = vweird.f32 %v1387
    %vm1395 = vmor %vm1393, %vm1394
    %v1396 = vsel %vm1395, %v1387, %v1392
    %v1397 = vrsqrt.pop %v802
    %v1398 = vmul.f32 %v1397, %v802
    %v1399 = vmul.f32 %v1398, %v1397
    %v1400 = vmul.f32 0.5, %v1399
    %v1401 = vsub.f32 1.5, %v1400
    %v1402 = vmul.f32 %v1397, %v1401
    %vm1403 = vweird.f32 %v802
    %vm1404 = vweird.f32 %v1397
    %vm1405 = vmor %vm1403, %vm1404
    %v1406 = vsel %vm1405, %v1397, %v1402
    %v1407 = vrsqrt.pop %v803
    %v1408 = vmul.f32 %v1407, %v803
    %v1409 = vmul.f32 %v1408, %v1407
    %v1410 = vmul.f32 0.5, %v1409
    %v1411 = vsub.f32 1.5, %v1410
    %v1412 = vmul.f32 %v1407, %v1411
    %vm1413 = vweird.f32 %v803
    %vm1414 = vweird.f32 %v1407
    %vm1415 = vmor %vm1413, %vm1414
    %v1416 = vsel %vm1415, %v1407, %v1412
    %v1417 = vrsqrt.pop %v804
    %v1418 = vmul.f32 %v1417, %v804
    %v1419 = vmul.f32 %v1418, %v1417
    %v1420 = vmul.f32 0.5, %v1419
    %v1421 = vsub.f32 1.5, %v1420
    %v1422 = vmul.f32 %v1417, %v1421
    %vm1423 = vweird.f32 %v804
    %vm1424 = vweird.f32 %v1417
    %vm1425 = vmor %vm1423, %vm1424
    %v1426 = vsel %vm1425, %v1417, %v1422
    %v1427 = vrsqrt.pop %v805
    %v1428 = vmul.f32 %v1427, %v805
    %v1429 = vmul.f32 %v1428, %v1427
    %v1430 = vmul.f32 0.5, %v1429
    %v1431 = vsub.f32 1.5, %v1430
    %v1432 = vmul.f32 %v1427, %v1431
    %vm1433 = vweird.f32 %v805
    %vm1434 = vweird.f32 %v1427
    %vm1435 = vmor %vm1433, %vm1434
    %v1436 = vsel %vm1435, %v1427, %v1432
    %v1437 = vrsqrt.pop %v806
    %v1438 = vmul.f32 %v1437, %v806
    %v1439 = vmul.f32 %v1438, %v1437
    %v1440 = vmul.f32 0.5, %v1439
    %v1441 = vsub.f32 1.5, %v1440
    %v1442 = vmul.f32 %v1437, %v1441
    %vm1443 = vweird.f32 %v806
    %vm1444 = vweird.f32 %v1437
    %vm1445 = vmor %vm1443, %vm1444
    %v1446 = vsel %vm1445, %v1437, %v1442
    %v1447 = vld [vmem:[%s1] sm:$0x1]
    %v1448 = vld [vmem:[%s2] sm:$0x1]
    %v1449 = vmul.f32 %v359, %v816
    %v1450 = vmul.f32 %v360, %v826
    %v1451 = vmul.f32 %v361, %v836
    %v1452 = vmul.f32 %v362, %v846
    %v1453 = vmul.f32 %v363, %v856
    %v1454 = vmul.f32 %v364, %v866
    %v1455 = vmul.f32 %v365, %v876
    %v1456 = vmul.f32 %v366, %v886
    %v1457 = vmul.f32 %v367, %v896
    %v1458 = vmul.f32 %v368, %v906
    %v1459 = vmul.f32 %v369, %v916
    %v1460 = vmul.f32 %v370, %v926
    %v1461 = vmul.f32 %v371, %v936
    %v1462 = vmul.f32 %v372, %v946
    %v1463 = vmul.f32 %v373, %v956
    %v1464 = vmul.f32 %v374, %v966
    %v1465 = vmul.f32 %v375, %v976
    %v1466 = vmul.f32 %v376, %v986
    %v1467 = vmul.f32 %v377, %v996
    %v1468 = vmul.f32 %v378, %v1006
    %v1469 = vmul.f32 %v379, %v1016
    %v1470 = vmul.f32 %v380, %v1026
    %v1471 = vmul.f32 %v381, %v1036
    %v1472 = vmul.f32 %v382, %v1046
    %v1473 = vmul.f32 %v383, %v1056
    %v1474 = vmul.f32 %v384, %v1066
    %v1475 = vmul.f32 %v385, %v1076
    %v1476 = vmul.f32 %v386, %v1086
    %v1477 = vmul.f32 %v387, %v1096
    %v1478 = vmul.f32 %v388, %v1106
    %v1479 = vmul.f32 %v389, %v1116
    %v1480 = vmul.f32 %v390, %v1126
    %v1481 = vmul.f32 %v391, %v1136
    %v1482 = vmul.f32 %v392, %v1146
    %v1483 = vmul.f32 %v393, %v1156
    %v1484 = vmul.f32 %v394, %v1166
    %v1485 = vmul.f32 %v395, %v1176
    %v1486 = vmul.f32 %v396, %v1186
    %v1487 = vmul.f32 %v397, %v1196
    %v1488 = vmul.f32 %v398, %v1206
    %v1489 = vmul.f32 %v399, %v1216
    %v1490 = vmul.f32 %v400, %v1226
    %v1491 = vmul.f32 %v401, %v1236
    %v1492 = vmul.f32 %v402, %v1246
    %v1493 = vmul.f32 %v403, %v1256
    %v1494 = vmul.f32 %v404, %v1266
    %v1495 = vmul.f32 %v405, %v1276
    %v1496 = vmul.f32 %v406, %v1286
    %v1497 = vmul.f32 %v407, %v1296
    %v1498 = vmul.f32 %v408, %v1306
    %v1499 = vmul.f32 %v409, %v1316
    %v1500 = vmul.f32 %v410, %v1326
    %v1501 = vmul.f32 %v411, %v1336
    %v1502 = vmul.f32 %v412, %v1346
    %v1503 = vmul.f32 %v413, %v1356
    %v1504 = vmul.f32 %v414, %v1366
    %v1505 = vmul.f32 %v415, %v1376
    %v1506 = vmul.f32 %v416, %v1386
    %v1507 = vmul.f32 %v417, %v1396
    %v1508 = vmul.f32 %v418, %v1406
    %v1509 = vmul.f32 %v419, %v1416
    %v1510 = vmul.f32 %v420, %v1426
    %v1511 = vmul.f32 %v421, %v1436
    %v1512 = vmul.f32 %v422, %v1446
    %v1514 = vperm.slane %v1447, 0
    %v1516 = vmul.f32 %v1449, %v1514
    %v1517 = vmul.f32 %v1450, %v1514
    %v1518 = vmul.f32 %v1451, %v1514
    %v1519 = vmul.f32 %v1452, %v1514
    %v1520 = vmul.f32 %v1453, %v1514
    %v1521 = vmul.f32 %v1454, %v1514
    %v1522 = vmul.f32 %v1455, %v1514
    %v1523 = vmul.f32 %v1456, %v1514
    %v1524 = vmul.f32 %v1457, %v1514
    %v1525 = vmul.f32 %v1458, %v1514
    %v1526 = vmul.f32 %v1459, %v1514
    %v1527 = vmul.f32 %v1460, %v1514
    %v1528 = vmul.f32 %v1461, %v1514
    %v1529 = vmul.f32 %v1462, %v1514
    %v1530 = vmul.f32 %v1463, %v1514
    %v1531 = vmul.f32 %v1464, %v1514
    %v1532 = vmul.f32 %v1465, %v1514
    %v1533 = vmul.f32 %v1466, %v1514
    %v1534 = vmul.f32 %v1467, %v1514
    %v1535 = vmul.f32 %v1468, %v1514
    %v1536 = vmul.f32 %v1469, %v1514
    %v1537 = vmul.f32 %v1470, %v1514
    %v1538 = vmul.f32 %v1471, %v1514
    %v1539 = vmul.f32 %v1472, %v1514
    %v1540 = vmul.f32 %v1473, %v1514
    %v1541 = vmul.f32 %v1474, %v1514
    %v1542 = vmul.f32 %v1475, %v1514
    %v1543 = vmul.f32 %v1476, %v1514
    %v1544 = vmul.f32 %v1477, %v1514
    %v1545 = vmul.f32 %v1478, %v1514
    %v1546 = vmul.f32 %v1479, %v1514
    %v1547 = vmul.f32 %v1480, %v1514
    %v1548 = vmul.f32 %v1481, %v1514
    %v1549 = vmul.f32 %v1482, %v1514
    %v1550 = vmul.f32 %v1483, %v1514
    %v1551 = vmul.f32 %v1484, %v1514
    %v1552 = vmul.f32 %v1485, %v1514
    %v1553 = vmul.f32 %v1486, %v1514
    %v1554 = vmul.f32 %v1487, %v1514
    %v1555 = vmul.f32 %v1488, %v1514
    %v1556 = vmul.f32 %v1489, %v1514
    %v1557 = vmul.f32 %v1490, %v1514
    %v1558 = vmul.f32 %v1491, %v1514
    %v1559 = vmul.f32 %v1492, %v1514
    %v1560 = vmul.f32 %v1493, %v1514
    %v1561 = vmul.f32 %v1494, %v1514
    %v1562 = vmul.f32 %v1495, %v1514
    %v1563 = vmul.f32 %v1496, %v1514
    %v1564 = vmul.f32 %v1497, %v1514
    %v1565 = vmul.f32 %v1498, %v1514
    %v1566 = vmul.f32 %v1499, %v1514
    %v1567 = vmul.f32 %v1500, %v1514
    %v1568 = vmul.f32 %v1501, %v1514
    %v1569 = vmul.f32 %v1502, %v1514
    %v1570 = vmul.f32 %v1503, %v1514
    %v1571 = vmul.f32 %v1504, %v1514
    %v1572 = vmul.f32 %v1505, %v1514
    %v1573 = vmul.f32 %v1506, %v1514
    %v1574 = vmul.f32 %v1507, %v1514
    %v1575 = vmul.f32 %v1508, %v1514
    %v1576 = vmul.f32 %v1509, %v1514
    %v1577 = vmul.f32 %v1510, %v1514
    %v1578 = vmul.f32 %v1511, %v1514
    %v1579 = vmul.f32 %v1512, %v1514
    %v1581 = vperm.slane %v1448, 0
    %v1583 = vadd.f32 %v1516, %v1581
    %v1584 = vadd.f32 %v1517, %v1581
    %v1585 = vadd.f32 %v1518, %v1581
    %v1586 = vadd.f32 %v1519, %v1581
    %v1587 = vadd.f32 %v1520, %v1581
    %v1588 = vadd.f32 %v1521, %v1581
    %v1589 = vadd.f32 %v1522, %v1581
    %v1590 = vadd.f32 %v1523, %v1581
    %v1591 = vadd.f32 %v1524, %v1581
    %v1592 = vadd.f32 %v1525, %v1581
    %v1593 = vadd.f32 %v1526, %v1581
    %v1594 = vadd.f32 %v1527, %v1581
    %v1595 = vadd.f32 %v1528, %v1581
    %v1596 = vadd.f32 %v1529, %v1581
    %v1597 = vadd.f32 %v1530, %v1581
    %v1598 = vadd.f32 %v1531, %v1581
    %v1599 = vadd.f32 %v1532, %v1581
    %v1600 = vadd.f32 %v1533, %v1581
    %v1601 = vadd.f32 %v1534, %v1581
    %v1602 = vadd.f32 %v1535, %v1581
    %v1603 = vadd.f32 %v1536, %v1581
    %v1604 = vadd.f32 %v1537, %v1581
    %v1605 = vadd.f32 %v1538, %v1581
    %v1606 = vadd.f32 %v1539, %v1581
    %v1607 = vadd.f32 %v1540, %v1581
    %v1608 = vadd.f32 %v1541, %v1581
    %v1609 = vadd.f32 %v1542, %v1581
    %v1610 = vadd.f32 %v1543, %v1581
    %v1611 = vadd.f32 %v1544, %v1581
    %v1612 = vadd.f32 %v1545, %v1581
    %v1613 = vadd.f32 %v1546, %v1581
    %v1614 = vadd.f32 %v1547, %v1581
    %v1615 = vadd.f32 %v1548, %v1581
    %v1616 = vadd.f32 %v1549, %v1581
    %v1617 = vadd.f32 %v1550, %v1581
    %v1618 = vadd.f32 %v1551, %v1581
    %v1619 = vadd.f32 %v1552, %v1581
    %v1620 = vadd.f32 %v1553, %v1581
    %v1621 = vadd.f32 %v1554, %v1581
    %v1622 = vadd.f32 %v1555, %v1581
    %v1623 = vadd.f32 %v1556, %v1581
    %v1624 = vadd.f32 %v1557, %v1581
    %v1625 = vadd.f32 %v1558, %v1581
    %v1626 = vadd.f32 %v1559, %v1581
    %v1627 = vadd.f32 %v1560, %v1581
    %v1628 = vadd.f32 %v1561, %v1581
    %v1629 = vadd.f32 %v1562, %v1581
    %v1630 = vadd.f32 %v1563, %v1581
    %v1631 = vadd.f32 %v1564, %v1581
    %v1632 = vadd.f32 %v1565, %v1581
    %v1633 = vadd.f32 %v1566, %v1581
    %v1634 = vadd.f32 %v1567, %v1581
    %v1635 = vadd.f32 %v1568, %v1581
    %v1636 = vadd.f32 %v1569, %v1581
    %v1637 = vadd.f32 %v1570, %v1581
    %v1638 = vadd.f32 %v1571, %v1581
    %v1639 = vadd.f32 %v1572, %v1581
    %v1640 = vadd.f32 %v1573, %v1581
    %v1641 = vadd.f32 %v1574, %v1581
    %v1642 = vadd.f32 %v1575, %v1581
    %v1643 = vadd.f32 %v1576, %v1581
    %v1644 = vadd.f32 %v1577, %v1581
    %v1645 = vadd.f32 %v1578, %v1581
    %v1646 = vadd.f32 %v1579, %v1581
    %1647 = vst.msk [vmem:[#allocation5] sm:$0xff] %vm95, %v1583
    %1648 = vst.msk [vmem:[#allocation5 + $0x8] sm:$0xff] %vm95, %v1584
    %1649 = vst.msk [vmem:[#allocation5 + $0x10] sm:$0xff] %vm95, %v1585
    %1650 = vst.msk [vmem:[#allocation5 + $0x18] sm:$0xff] %vm95, %v1586
    %1651 = vst.msk [vmem:[#allocation5 + $0x20] sm:$0xff] %vm95, %v1587
    %1652 = vst.msk [vmem:[#allocation5 + $0x28] sm:$0xff] %vm95, %v1588
    %1653 = vst.msk [vmem:[#allocation5 + $0x30] sm:$0xff] %vm95, %v1589
    %1654 = vst.msk [vmem:[#allocation5 + $0x38] sm:$0xff] %vm95, %v1590
    %1655 = vst.msk [vmem:[#allocation5 + $0x40] sm:$0xff] %vm95, %v1591
    %1656 = vst.msk [vmem:[#allocation5 + $0x48] sm:$0xff] %vm95, %v1592
    %1657 = vst.msk [vmem:[#allocation5 + $0x50] sm:$0xff] %vm95, %v1593
    %1658 = vst.msk [vmem:[#allocation5 + $0x58] sm:$0xff] %vm95, %v1594
    %1659 = vst.msk [vmem:[#allocation5 + $0x60] sm:$0xff] %vm95, %v1595
    %1660 = vst.msk [vmem:[#allocation5 + $0x68] sm:$0xff] %vm95, %v1596
    %1661 = vst.msk [vmem:[#allocation5 + $0x70] sm:$0xff] %vm95, %v1597
    %1662 = vst.msk [vmem:[#allocation5 + $0x78] sm:$0xff] %vm95, %v1598
    %1663 = vst.msk [vmem:[#allocation5 + $0x80] sm:$0xff] %vm95, %v1599
    %1664 = vst.msk [vmem:[#allocation5 + $0x88] sm:$0xff] %vm95, %v1600
    %1665 = vst.msk [vmem:[#allocation5 + $0x90] sm:$0xff] %vm95, %v1601
    %1666 = vst.msk [vmem:[#allocation5 + $0x98] sm:$0xff] %vm95, %v1602
    %1667 = vst.msk [vmem:[#allocation5 + $0xa0] sm:$0xff] %vm95, %v1603
    %1668 = vst.msk [vmem:[#allocation5 + $0xa8] sm:$0xff] %vm95, %v1604
    %1669 = vst.msk [vmem:[#allocation5 + $0xb0] sm:$0xff] %vm95, %v1605
    %1670 = vst.msk [vmem:[#allocation5 + $0xb8] sm:$0xff] %vm95, %v1606
    %1671 = vst.msk [vmem:[#allocation5 + $0xc0] sm:$0xff] %vm95, %v1607
    %1672 = vst.msk [vmem:[#allocation5 + $0xc8] sm:$0xff] %vm95, %v1608
    %1673 = vst.msk [vmem:[#allocation5 + $0xd0] sm:$0xff] %vm95, %v1609
    %1674 = vst.msk [vmem:[#allocation5 + $0xd8] sm:$0xff] %vm95, %v1610
    %1675 = vst.msk [vmem:[#allocation5 + $0xe0] sm:$0xff] %vm95, %v1611
    %1676 = vst.msk [vmem:[#allocation5 + $0xe8] sm:$0xff] %vm95, %v1612
    %1677 = vst.msk [vmem:[#allocation5 + $0xf0] sm:$0xff] %vm95, %v1613
    %1678 = vst.msk [vmem:[#allocation5 + $0xf8] sm:$0xff] %vm95, %v1614
    %1679 = vst.msk [vmem:[#allocation5 + $0x100] sm:$0xff] %vm95, %v1615
    %1680 = vst.msk [vmem:[#allocation5 + $0x108] sm:$0xff] %vm95, %v1616
    %1681 = vst.msk [vmem:[#allocation5 + $0x110] sm:$0xff] %vm95, %v1617
    %1682 = vst.msk [vmem:[#allocation5 + $0x118] sm:$0xff] %vm95, %v1618
    %1683 = vst.msk [vmem:[#allocation5 + $0x120] sm:$0xff] %vm95, %v1619
    %1684 = vst.msk [vmem:[#allocation5 + $0x128] sm:$0xff] %vm95, %v1620
    %1685 = vst.msk [vmem:[#allocation5 + $0x130] sm:$0xff] %vm95, %v1621
    %1686 = vst.msk [vmem:[#allocation5 + $0x138] sm:$0xff] %vm95, %v1622
    %1687 = vst.msk [vmem:[#allocation5 + $0x140] sm:$0xff] %vm95, %v1623
    %1688 = vst.msk [vmem:[#allocation5 + $0x148] sm:$0xff] %vm95, %v1624
    %1689 = vst.msk [vmem:[#allocation5 + $0x150] sm:$0xff] %vm95, %v1625
    %1690 = vst.msk [vmem:[#allocation5 + $0x158] sm:$0xff] %vm95, %v1626
    %1691 = vst.msk [vmem:[#allocation5 + $0x160] sm:$0xff] %vm95, %v1627
    %1692 = vst.msk [vmem:[#allocation5 + $0x168] sm:$0xff] %vm95, %v1628
    %1693 = vst.msk [vmem:[#allocation5 + $0x170] sm:$0xff] %vm95, %v1629
    %1694 = vst.msk [vmem:[#allocation5 + $0x178] sm:$0xff] %vm95, %v1630
    %1695 = vst.msk [vmem:[#allocation5 + $0x180] sm:$0xff] %vm95, %v1631
    %1696 = vst.msk [vmem:[#allocation5 + $0x188] sm:$0xff] %vm95, %v1632
    %1697 = vst.msk [vmem:[#allocation5 + $0x190] sm:$0xff] %vm95, %v1633
    %1698 = vst.msk [vmem:[#allocation5 + $0x198] sm:$0xff] %vm95, %v1634
    %1699 = vst.msk [vmem:[#allocation5 + $0x1a0] sm:$0xff] %vm95, %v1635
    %1700 = vst.msk [vmem:[#allocation5 + $0x1a8] sm:$0xff] %vm95, %v1636
    %1701 = vst.msk [vmem:[#allocation5 + $0x1b0] sm:$0xff] %vm95, %v1637
    %1702 = vst.msk [vmem:[#allocation5 + $0x1b8] sm:$0xff] %vm95, %v1638
    %1703 = vst.msk [vmem:[#allocation5 + $0x1c0] sm:$0xff] %vm95, %v1639
    %1704 = vst.msk [vmem:[#allocation5 + $0x1c8] sm:$0xff] %vm95, %v1640
    %1705 = vst.msk [vmem:[#allocation5 + $0x1d0] sm:$0xff] %vm95, %v1641
    %1706 = vst.msk [vmem:[#allocation5 + $0x1d8] sm:$0xff] %vm95, %v1642
    %1707 = vst.msk [vmem:[#allocation5 + $0x1e0] sm:$0xff] %vm95, %v1643
    %1708 = vst.msk [vmem:[#allocation5 + $0x1e8] sm:$0xff] %vm95, %v1644
    %1709 = vst.msk [vmem:[#allocation5 + $0x1f0] sm:$0xff] %vm95, %v1645
    %1710 = vst.msk [vmem:[#allocation5 + $0x1f8] sm:$0xff] %vm95, %v1646
    // Predicated region
    $region18: #{withbias_layernorm.1} parent=1 // pred_check
      _
    $region19: #{withbias_layernorm.1} parent=1 // pred_check_branch
      %1712 = sbr.rel (0) target = $region21
    $region20: #{withbias_layernorm.1} parent=1 // pred_region
      %1714 = vsyncadd [#allocation4], 0
      %s1715 = sshll.u32 [#allocation5], 4
      %s1716 = int_to_ptr.vmem [resolvable:$true] %s1715
      %s1717 = sshll.u32 %s3, 4
      %s1718 = int_to_ptr.hbm [resolvable:$true] %s1717
      %1723 = dma.vmem_to_hbm [thread:$0]  %s1716, 8192, %s1718, [#allocation4], 128, 128, 8
    $region21: #{withbias_layernorm.1} parent=1 // pred_fallthru
      _
    // Predicated region
    $region22: #{withbias_layernorm.1} parent=1 // pred_check
      _
    $region23: #{withbias_layernorm.1} parent=1 // pred_check_branch
      %1725 = sbr.rel (0) target = $region25
    $region24: #{withbias_layernorm.1} parent=1 // pred_region
      %1727 = dma.done [#allocation4], 8192
    $region25: #{withbias_layernorm.1} parent=1 // pred_fallthru
      _
    %1728 = vsyncpa [#allocation3], 1
    %1729 = vsyncpa [#allocation4], 1

</llo_original>
